<compile_context>
chip_gen: v7x
topology: tpu7x:2x2x1
jax: 0.10.0
libtpu: 0.0.40
codegen_flags: <defaults>
</compile_context>

<pallas_src>
import functools

import jax
import jax.numpy as jnp
from jax.experimental import pallas as pl
from jax.experimental.pallas import tpu as pltpu


def _ceil_to(x, m):
    return ((x + m - 1) // m) * m


# ---------------------------------------------------------------------------
# Generic tiled matmul + bias kernel (parallel grid, bf16 operands, f32 accum).
# Used for the hoisted input projection (X @ W_ih + b) and the deferred output
# projection (H @ W_proj + b_proj).
# ---------------------------------------------------------------------------
def _matmul_bias_kernel(x_ref, w_ref, b_ref, o_ref, acc_ref):
    k = pl.program_id(2)

    @pl.when(k == 0)
    def _():
        acc_ref[...] = jnp.zeros_like(acc_ref)

    acc_ref[...] += jnp.dot(x_ref[...], w_ref[...],
                            preferred_element_type=jnp.float32)

    @pl.when(k == pl.num_programs(2) - 1)
    def _():
        o_ref[...] = (acc_ref[...] + b_ref[...]).astype(o_ref.dtype)


def matmul_bias(x, w, b, *, tm=256, tn=256, tk=512,
                operand_dtype=jnp.bfloat16, out_dtype=jnp.float32):
    """(M,K) @ (K,N) + (N,) -> (M,N).  bf16 operands, f32 accumulation."""
    M, K = x.shape
    Kw, N = w.shape
    assert K == Kw, (K, Kw)
    # Clamp tiles only when the array itself is small (never shrinks a full
    # MXU pass at large M/N); keep the sublane dim a multiple of 16 for bf16.
    tm = min(tm, _ceil_to(M, 16))
    tn = min(tn, _ceil_to(N, 128))
    tk = min(tk, _ceil_to(K, 128))
    Mp, Kp, Np = _ceil_to(M, tm), _ceil_to(K, tk), _ceil_to(N, tn)

    xp = jnp.pad(x.astype(operand_dtype), ((0, Mp - M), (0, Kp - K)))
    wp = jnp.pad(w.astype(operand_dtype), ((0, Kp - K), (0, Np - N)))
    bp = jnp.pad(b.astype(jnp.float32), ((0, Np - N),)).reshape(1, Np)

    out = pl.pallas_call(
        _matmul_bias_kernel,
        out_shape=jax.ShapeDtypeStruct((Mp, Np), out_dtype),
        grid_spec=pltpu.PrefetchScalarGridSpec(
            num_scalar_prefetch=0,
            grid=(Mp // tm, Np // tn, Kp // tk),
            in_specs=[
                pl.BlockSpec((tm, tk), lambda i, j, k: (i, k)),
                pl.BlockSpec((tk, tn), lambda i, j, k: (k, j)),
                pl.BlockSpec((1, tn), lambda i, j, k: (0, j)),
            ],
            out_specs=pl.BlockSpec((tm, tn), lambda i, j, k: (i, j)),
            scratch_shapes=[pltpu.VMEM((tm, tn), jnp.float32)],
        ),
        compiler_params=pltpu.CompilerParams(
            dimension_semantics=("parallel", "parallel", "arbitrary"),
            vmem_limit_bytes=64 * 1024 * 1024),
    )(xp, wp, bp)
    return out[:M, :N]


# ---------------------------------------------------------------------------
# LSTM recurrence kernel: each grid step processes one batch chunk x tb
# timesteps.  Only the serial part (h @ W_hh + gate nonlinearities + state
# update) lives here; gx already includes x @ W_ih + b_ih + b_hh.
# ---------------------------------------------------------------------------
def _lstm_recurrence_kernel(gx_ref, whh_ref, h_ref, h_sc, c_sc, *, tb, hp):
    """
    gx_ref:  (tb, bb, 4*Hp) bf16   precomputed input gates for this chunk
    whh_ref: (Hp, 4*Hp)     bf16   hidden->gates weight (single-buffered)
    h_ref:   (tb, bb, Hp)   bf16   hidden states emitted for every timestep
    h_sc/c_sc: (bb, Hp)     f32    recurrent state carried across time chunks
    """
    t_chunk = pl.program_id(1)

    @pl.when(t_chunk == 0)
    def _():
        h_sc[...] = jnp.zeros_like(h_sc)
        c_sc[...] = jnp.zeros_like(c_sc)

    whh = whh_ref[...]  # hoisted: loop-invariant weight load (bf16)

    def body(t, carry):
        h, c = carry  # f32 recurrent state
        gates = gx_ref[t].astype(jnp.float32) + jnp.dot(
            h.astype(whh.dtype), whh, preferred_element_type=jnp.float32)
        # PyTorch gate order i, f, g, o; each gate lane-aligned to Hp (x128)
        i_g = jax.nn.sigmoid(gates[:, 0 * hp:1 * hp])
        f_g = jax.nn.sigmoid(gates[:, 1 * hp:2 * hp])
        g_g = jnp.tanh(gates[:, 2 * hp:3 * hp])
        o_g = jax.nn.sigmoid(gates[:, 3 * hp:4 * hp])
        c_new = f_g * c + i_g * g_g
        h_new = o_g * jnp.tanh(c_new)
        h_ref[t] = h_new.astype(h_ref.dtype)
        return h_new, c_new

    h_last, c_last = jax.lax.fori_loop(
        0, tb, body, (h_sc[...], c_sc[...]), unroll=min(tb, 8))
    h_sc[...] = h_last
    c_sc[...] = c_last


def lstm_recurrence(gx, w_hh_p, *, time_block=None, batch_block=None,
                    vmem_budget_bytes=32 * 1024 * 1024):
    """gx: (T, B, 4*Hp) time-major precomputed gates -> h: (T, B, Hp) bf16.

    batch_block: set to Bp//2 on v7x to split the batch across both TensorCores
    (leading grid axis is "parallel"); default keeps a single chunk.
    """
    T, B, G = gx.shape
    Hp = G // 4
    Bp = _ceil_to(B, 8)
    bb = Bp if batch_block is None else batch_block
    assert Bp % bb == 0 and bb % 8 == 0, (Bp, bb)

    if time_block is None:
        # VMEM footprint: gx (bf16, double-buffered) + h out (bf16, dbl-buf)
        # per timestep, plus W_hh (bf16, single-buffered) and f32 h/c state.
        bytes_per_t = 2 * (bb * G * 2) + 2 * (bb * Hp * 2)
        fixed = Hp * G * 2 + 2 * (bb * Hp * 4)
        time_block = max(1, min(32, (vmem_budget_bytes - fixed) // bytes_per_t))
    tb = min(int(time_block), T)
    Tp = _ceil_to(T, tb)

    gx_p = jnp.pad(gx.astype(jnp.bfloat16), ((0, Tp - T), (0, Bp - B), (0, 0)))
    whh_bf16 = w_hh_p.astype(jnp.bfloat16)

    # W_hh is loop-invariant (constant index_map): single-buffer it to save
    # Hp*4Hp bytes of VMEM (the biggest line item on v7x's 64 MiB budget).
    whh_idx = lambda b, s: (0, 0)
    try:
        whh_spec = pl.BlockSpec((Hp, G), whh_idx, pipeline_mode=pl.Buffered(1))
    except TypeError:  # TODO(synk): older jax without pipeline_mode kwarg
        whh_spec = pl.BlockSpec((Hp, G), whh_idx)

    kernel = functools.partial(_lstm_recurrence_kernel, tb=tb, hp=Hp)
    h_all = pl.pallas_call(
        kernel,
        out_shape=jax.ShapeDtypeStruct((Tp, Bp, Hp), jnp.bfloat16),
        grid_spec=pltpu.PrefetchScalarGridSpec(
            num_scalar_prefetch=0,
            grid=(Bp // bb, Tp // tb),
            in_specs=[
                pl.BlockSpec((tb, bb, G), lambda b, s: (s, b, 0)),   # gx chunk
                whh_spec,                                            # W_hh
            ],
            out_specs=pl.BlockSpec((tb, bb, Hp), lambda b, s: (s, b, 0)),
            scratch_shapes=[
                pltpu.VMEM((bb, Hp), jnp.float32),   # h state
                pltpu.VMEM((bb, Hp), jnp.float32),   # c state
            ],
        ),
        compiler_params=pltpu.CompilerParams(
            dimension_semantics=("parallel", "arbitrary"),
            vmem_limit_bytes=64 * 1024 * 1024),
    )(gx_p, whh_bf16)
    return h_all[:T, :B]


# ---------------------------------------------------------------------------
# Weight preparation + full forward
# ---------------------------------------------------------------------------
def _pad_gates(w, h, hp):
    """(..., 4H) -> (..., 4Hp): each PyTorch gate block (i,f,g,o) padded to Hp."""
    lead = w.shape[:-1]
    w4 = w.reshape(lead + (4, h))
    w4 = jnp.pad(w4, [(0, 0)] * len(lead) + [(0, 0), (0, hp - h)])
    return w4.reshape(lead + (4 * hp,))


@jax.jit
def rnn_lm_forward(tokens, emb_table, w_ih, w_hh, bias, w_proj, b_proj):
    """tokens: (B, T) int32 -> logits (B, T, V) float32 (eval-mode forward)."""
    B, T = tokens.shape
    E = emb_table.shape[1]
    H = w_hh.shape[0]
    V = w_proj.shape[1]
    Hp = _ceil_to(H, 128)

    # Glue: nn.Embedding gather (+ identity dropout), then time-major layout.
    # TODO(synk): embedding gather + transpose left in XLA (scalar-prefetch
    # row-gather fusion is low priority at these sizes).
    emb = emb_table[tokens]                      # (B, T, E)
    x_tm = jnp.transpose(emb, (1, 0, 2))         # (T, B, E)  (small-E transpose)
    x_flat = x_tm.reshape(T * B, E)

    # Lane-pad the gate dimension so each gate occupies a 128-lane-aligned slab.
    w_ih_p = _pad_gates(w_ih, H, Hp)                                   # (E, 4Hp)
    w_hh_p = jnp.pad(_pad_gates(w_hh, H, Hp), ((0, Hp - H), (0, 0)))   # (Hp, 4Hp)
    bias_p = _pad_gates(bias, H, Hp)                                   # (4Hp,)
    w_proj_p = jnp.pad(w_proj, ((0, Hp - H), (0, 0)))                  # (Hp, V)

    # 1) Hoisted input projection: one large parallel MXU matmul, bf16 operands,
    #    bias folded in, gx stored in bf16 (halves the HBM round trip).
    gx = matmul_bias(x_flat, w_ih_p, bias_p, out_dtype=jnp.bfloat16)   # (T*B, 4Hp)
    gx = gx.reshape(T, B, 4 * Hp)

    # 2) Serial LSTM recurrence: only h @ W_hh + elementwise per step, T chunked.
    h_tm = lstm_recurrence(gx, w_hh_p)           # (T, B, Hp) bf16

    # 3) Transpose the (small) hidden states rather than the (large) logits,
    #    then the deferred output projection as a big parallel tiled matmul.
    h_bt = jnp.transpose(h_tm, (1, 0, 2)).reshape(B * T, Hp)           # (B*T, Hp)
    logits = matmul_bias(h_bt, w_proj_p, b_proj, tm=512)               # (B*T, V)
    return logits.reshape(B, T, V)


def reference_forward(tokens, emb_table, w_ih, w_hh, bias, w_proj, b_proj,
                      mirror_bf16=False):
    """Pure-JAX reference (PyTorch LSTM math, batch_first, eval mode).

    mirror_bf16=True reproduces the kernel's precision choices (bf16 matmul
    operands / bf16 gx and h storage, f32 state & accumulation) for a tight
    numerical check.
    """
    emb = emb_table[tokens]                      # (B, T, E)
    B, T, E = emb.shape
    H = w_hh.shape[0]

    def mm(a, b):
        if mirror_bf16:
            return jnp.dot(a.astype(jnp.bfloat16), b.astype(jnp.bfloat16),
                           preferred_element_type=jnp.float32)
        return a @ b

    def rnd(x):
        return x.astype(jnp.bfloat16).astype(jnp.float32) if mirror_bf16 else x

    x_tm = jnp.transpose(emb, (1, 0, 2))         # (T, B, E)
    gx = rnd(mm(x_tm.reshape(T * B, E), w_ih) + bias).reshape(T, B, 4 * H)

    def step(carry, gx_t):
        h, c = carry
        gates = gx_t + mm(h, w_hh)
        i_g = jax.nn.sigmoid(gates[:, 0 * H:1 * H])
        f_g = jax.nn.sigmoid(gates[:, 1 * H:2 * H])
        g_g = jnp.tanh(gates[:, 2 * H:3 * H])
        o_g = jax.nn.sigmoid(gates[:, 3 * H:4 * H])
        c_new = f_g * c + i_g * g_g
        h_new = o_g * jnp.tanh(c_new)
        return (h_new, c_new), rnd(h_new)

    h0 = jnp.zeros((B, H), jnp.float32)
    c0 = jnp.zeros((B, H), jnp.float32)
    _, hs = jax.lax.scan(step, (h0, c0), gx)
    hs = jnp.transpose(hs, (1, 0, 2))            # (B, T, H)
    logits = mm(hs.reshape(B * T, H), w_proj) + b_proj
    return logits.reshape(B, T, -1)


if __name__ == "__main__":
    # options (synthetic, deterministic):
    options = dict(
        eos_idx=1, dropout=0.0, num_embeddings=64, embedding_dim=32,
        padding_idx=0, rnn_type="nn.LSTM", input_size=32, hidden_size=32,
        num_layers=1, output_dim=64, tie_weights=True,
    )
    B, T = 4, 8
    V = options["num_embeddings"]
    E = options["embedding_dim"]
    H = options["hidden_size"]

    key = jax.random.PRNGKey(0)
    k_emb, k_wih, k_whh, k_bih, k_bhh, k_bp, k_tok = jax.random.split(key, 7)

    # nn.Embedding init (normal), padding_idx row zeroed.
    emb_table = jax.random.normal(k_emb, (V, E), jnp.float32)
    emb_table = emb_table.at[options["padding_idx"]].set(0.0)

    # nn.LSTM init: uniform(-1/sqrt(H), 1/sqrt(H)); stored transposed for the kernel.
    k_lim = 1.0 / jnp.sqrt(jnp.float32(H))
    w_ih = jax.random.uniform(k_wih, (E, 4 * H), jnp.float32, -k_lim, k_lim)
    w_hh = jax.random.uniform(k_whh, (H, 4 * H), jnp.float32, -k_lim, k_lim)
    bias = (jax.random.uniform(k_bih, (4 * H,), jnp.float32, -k_lim, k_lim)
            + jax.random.uniform(k_bhh, (4 * H,), jnp.float32, -k_lim, k_lim))

    # tie_weights=True: projection.weight = lookup.weight  -> W_proj = emb_table.T
    w_proj = emb_table.T                          # (H, V)
    b_proj = jax.random.uniform(k_bp, (V,), jnp.float32, -k_lim, k_lim)

    tokens = jax.random.randint(k_tok, (B, T), 0, V, dtype=jnp.int32)

    logits = rnn_lm_forward(tokens, emb_table, w_ih, w_hh, bias, w_proj, b_proj)
    logits = jax.block_until_ready(logits)
    assert logits.shape == (B, T, V), logits.shape
    assert bool(jnp.all(jnp.isfinite(logits))), "non-finite logits"

    # Tight check against a reference that mirrors the kernel's bf16 precision.
    ref_bf16 = reference_forward(tokens, emb_table, w_ih, w_hh, bias,
                                 w_proj, b_proj, mirror_bf16=True)
    assert jnp.allclose(logits, ref_bf16, atol=1e-3, rtol=1e-3), \
        "mismatch vs bf16-mirrored reference"

    # Loose check against the full-f32 reference (bf16 matmul operands => looser tol).
    ref_f32 = reference_forward(tokens, emb_table, w_ih, w_hh, bias,
                                w_proj, b_proj, mirror_bf16=False)
    assert jnp.allclose(logits, ref_f32, atol=0.25, rtol=0.1), \
        "mismatch vs f32 reference"

    # TODO(synk): dropout is treated as eval-mode identity (PyTorch training-mode RNG not reproduced).
    print("KERNEL_OK")
</pallas_src>

<mosaic_0001>
module attributes {stable_mosaic.version = 11 : i64} {
  func.func @_matmul_bias_kernel(%arg0: i32, %arg1: i32, %arg2: i32, %arg3: memref<32x128xbf16, #tpu.memory_space<vmem>>, %arg4: memref<128x256xbf16, #tpu.memory_space<vmem>>, %arg5: memref<1x256xf32, #tpu.memory_space<vmem>>, %arg6: memref<32x256xbf16, #tpu.memory_space<vmem>>, %arg7: memref<32x256xf32, #tpu.memory_space<vmem>>) attributes {dimension_semantics = [#tpu.dimension_semantics<parallel>, #tpu.dimension_semantics<parallel>, #tpu.dimension_semantics<arbitrary>], iteration_bounds = array<i64: 1, 2, 1>, scalar_prefetch = 0 : i64, scratch_operands = 1 : i64, tpu.core_type = #tpu.core_type<tc>, window_params = [{transform_indices = @transform_0, window_bounds = array<i64: 32, 128>}, {transform_indices = @transform_1, window_bounds = array<i64: 128, 256>}, {transform_indices = @transform_2, window_bounds = array<i64: 1, 256>}, {transform_indices = @transform_3, window_bounds = array<i64: 32, 256>}]} {
    %c0_i32 = arith.constant 0 : i32
    %0 = arith.cmpi eq, %arg2, %c0_i32 : i32
    %1 = arith.extui %0 : i1 to i32
    %c0_i32_0 = arith.constant 0 : i32
    %2 = arith.cmpi ne, %1, %c0_i32_0 : i32
    scf.if %2 {
      %cst_10 = arith.constant 0.000000e+00 : f32
      %12 = vector.broadcast %cst_10 : f32 to vector<32x256xf32>
      %c0_11 = arith.constant 0 : index
      %c0_12 = arith.constant 0 : index
      %13 = vector.load %arg7[%c0_11, %c0_12] : memref<32x256xf32, #tpu.memory_space<vmem>>, vector<32x256xf32>
      tpu.vector_store %arg7[%c0_11, %c0_12], %12 {strides = array<i32>} : memref<32x256xf32, #tpu.memory_space<vmem>>, vector<32x256xf32>,
    } else {
    }
    %c0 = arith.constant 0 : index
    %c0_1 = arith.constant 0 : index
    %3 = vector.load %arg7[%c0, %c0_1] : memref<32x256xf32, #tpu.memory_space<vmem>>, vector<32x256xf32>
    %c0_2 = arith.constant 0 : index
    %c0_3 = arith.constant 0 : index
    %4 = vector.load %arg3[%c0_2, %c0_3] : memref<32x128xbf16, #tpu.memory_space<vmem>>, vector<32x128xbf16>
    %c0_4 = arith.constant 0 : index
    %c0_5 = arith.constant 0 : index
    %5 = vector.load %arg4[%c0_4, %c0_5] : memref<128x256xbf16, #tpu.memory_space<vmem>>, vector<128x256xbf16>
    %cst = arith.constant dense<0.000000e+00> : vector<32x256xf32>
    %6 = tpu.matmul %4, %5, %cst {dimension_numbers = #tpu.dot_dimension_numbers<[1], [0], [0], [1], [0, 0, 1, 1], [], []>} : vector<32x128xbf16>, vector<128x256xbf16>, vector<32x256xf32> -> vector<32x256xf32>
    %7 = arith.addf %3, %6 : vector<32x256xf32>
    %c0_6 = arith.constant 0 : index
    %c0_7 = arith.constant 0 : index
    %8 = vector.load %arg7[%c0_6, %c0_7] : memref<32x256xf32, #tpu.memory_space<vmem>>, vector<32x256xf32>
    tpu.vector_store %arg7[%c0_6, %c0_7], %7 {strides = array<i32>} : memref<32x256xf32, #tpu.memory_space<vmem>>, vector<32x256xf32>,
    %c0_i32_8 = arith.constant 0 : i32
    %9 = arith.cmpi eq, %arg2, %c0_i32_8 : i32
    %10 = arith.extui %9 : i1 to i32
    %c0_i32_9 = arith.constant 0 : i32
    %11 = arith.cmpi ne, %10, %c0_i32_9 : i32
    scf.if %11 {
      %c0_10 = arith.constant 0 : index
      %c0_11 = arith.constant 0 : index
      %12 = vector.load %arg7[%c0_10, %c0_11] : memref<32x256xf32, #tpu.memory_space<vmem>>, vector<32x256xf32>
      %c0_12 = arith.constant 0 : index
      %c0_13 = arith.constant 0 : index
      %13 = vector.load %arg5[%c0_12, %c0_13] : memref<1x256xf32, #tpu.memory_space<vmem>>, vector<1x256xf32>
      %14 = vector.broadcast %13 : vector<1x256xf32> to vector<32x256xf32>
      %15 = arith.addf %12, %14 : vector<32x256xf32>
      %16 = arith.truncf %15 : vector<32x256xf32> to vector<32x256xbf16>
      %c0_14 = arith.constant 0 : index
      %c0_15 = arith.constant 0 : index
      %17 = vector.load %arg6[%c0_14, %c0_15] : memref<32x256xbf16, #tpu.memory_space<vmem>>, vector<32x256xbf16>
      tpu.vector_store %arg6[%c0_14, %c0_15], %16 {strides = array<i32>} : memref<32x256xbf16, #tpu.memory_space<vmem>>, vector<32x256xbf16>,
    } else {
    }
    return
  }
  func.func @transform_0(%arg0: i32, %arg1: i32, %arg2: i32) -> (i32, i32) {
    %c0_i32 = arith.constant 0 : i32
    return %arg0, %arg2 : i32, i32
  }
  func.func @transform_1(%arg0: i32, %arg1: i32, %arg2: i32) -> (i32, i32) {
    %c0_i32 = arith.constant 0 : i32
    return %arg2, %arg1 : i32, i32
  }
  func.func @transform_2(%arg0: i32, %arg1: i32, %arg2: i32) -> (i32, i32) {
    %c0_i32 = arith.constant 0 : i32
    %c0_i32_0 = arith.constant 0 : i32
    return %c0_i32, %arg1 : i32, i32
  }
  func.func @transform_3(%arg0: i32, %arg1: i32, %arg2: i32) -> (i32, i32) {
    %c0_i32 = arith.constant 0 : i32
    return %arg0, %arg1 : i32, i32
  }
}

module attributes {stable_mosaic.version = 11 : i64} {
  func.func @_lstm_recurrence_kernel(%arg0: i32, %arg1: i32, %arg2: memref<8x8x512xbf16, #tpu.memory_space<vmem>>, %arg3: memref<128x512xbf16, #tpu.memory_space<vmem>>, %arg4: memref<8x8x128xbf16, #tpu.memory_space<vmem>>, %arg5: memref<8x128xf32, #tpu.memory_space<vmem>>, %arg6: memref<8x128xf32, #tpu.memory_space<vmem>>) attributes {dimension_semantics = [#tpu.dimension_semantics<parallel>, #tpu.dimension_semantics<arbitrary>], iteration_bounds = array<i64: 1, 1>, scalar_prefetch = 0 : i64, scratch_operands = 2 : i64, tpu.core_type = #tpu.core_type<tc>, window_params = [{transform_indices = @transform_0, window_bounds = array<i64: 8, 8, 512>}, {pipeline_mode = #tpu.pipeline_mode<synchronous>, transform_indices = @transform_1, window_bounds = array<i64: 128, 512>}, {transform_indices = @transform_2, window_bounds = array<i64: 8, 8, 128>}]} {
    %c0_i32 = arith.constant 0 : i32
    %0 = arith.cmpi eq, %arg1, %c0_i32 : i32
    %1 = arith.extui %0 : i1 to i32
    %c0_i32_0 = arith.constant 0 : i32
    %2 = arith.cmpi ne, %1, %c0_i32_0 : i32
    scf.if %2 {
      %cst_74 = arith.constant 0.000000e+00 : f32
      %304 = vector.broadcast %cst_74 : f32 to vector<8x128xf32>
      %c0_75 = arith.constant 0 : index
      %c0_76 = arith.constant 0 : index
      %305 = vector.load %arg5[%c0_75, %c0_76] : memref<8x128xf32, #tpu.memory_space<vmem>>, vector<8x128xf32>
      tpu.vector_store %arg5[%c0_75, %c0_76], %304 {strides = array<i32>} : memref<8x128xf32, #tpu.memory_space<vmem>>, vector<8x128xf32>,
      %cst_77 = arith.constant 0.000000e+00 : f32
      %306 = vector.broadcast %cst_77 : f32 to vector<8x128xf32>
      %c0_78 = arith.constant 0 : index
      %c0_79 = arith.constant 0 : index
      %307 = vector.load %arg6[%c0_78, %c0_79] : memref<8x128xf32, #tpu.memory_space<vmem>>, vector<8x128xf32>
      tpu.vector_store %arg6[%c0_78, %c0_79], %306 {strides = array<i32>} : memref<8x128xf32, #tpu.memory_space<vmem>>, vector<8x128xf32>,
    } else {
    }
    %c0 = arith.constant 0 : index
    %c0_1 = arith.constant 0 : index
    %3 = vector.load %arg3[%c0, %c0_1] : memref<128x512xbf16, #tpu.memory_space<vmem>>, vector<128x512xbf16>
    %c0_2 = arith.constant 0 : index
    %c0_3 = arith.constant 0 : index
    %4 = vector.load %arg5[%c0_2, %c0_3] : memref<8x128xf32, #tpu.memory_space<vmem>>, vector<8x128xf32>
    %c0_4 = arith.constant 0 : index
    %c0_5 = arith.constant 0 : index
    %5 = vector.load %arg6[%c0_4, %c0_5] : memref<8x128xf32, #tpu.memory_space<vmem>>, vector<8x128xf32>
    %c0_i32_6 = arith.constant 0 : i32
    %6 = arith.index_cast %c0_i32_6 : i32 to index
    %c0_7 = arith.constant 0 : index
    %c0_8 = arith.constant 0 : index
    %7 = vector.load %arg2[%6, %c0_7, %c0_8] : memref<8x8x512xbf16, #tpu.memory_space<vmem>>, vector<1x8x512xbf16>
    %8 = vector.shape_cast %7 : vector<1x8x512xbf16> to vector<8x512xbf16>
    %9 = arith.extf %8 : vector<8x512xbf16> to vector<8x512xf32>
    %10 = arith.truncf %4 : vector<8x128xf32> to vector<8x128xbf16>
    %cst = arith.constant dense<0.000000e+00> : vector<8x512xf32>
    %11 = tpu.matmul %10, %3, %cst {dimension_numbers = #tpu.dot_dimension_numbers<[1], [0], [0], [1], [0, 0, 1, 1], [], []>} : vector<8x128xbf16>, vector<128x512xbf16>, vector<8x512xf32> -> vector<8x512xf32>
    %12 = arith.addf %9, %11 : vector<8x512xf32>
    %13 = vector.extract_strided_slice %12 {offsets = [0, 0], sizes = [8, 128], strides = [1, 1]} : vector<8x512xf32> to vector<8x128xf32>
    %14 = arith.negf %13 : vector<8x128xf32>
    %15 = math.exp %14 : vector<8x128xf32>
    %cst_9 = arith.constant 1.000000e+00 : f32
    %16 = vector.broadcast %cst_9 : f32 to vector<8x128xf32>
    %17 = arith.addf %16, %15 : vector<8x128xf32>
    %18 = arith.divf %16, %17 : vector<8x128xf32>
    %19 = vector.extract_strided_slice %12 {offsets = [0, 128], sizes = [8, 128], strides = [1, 1]} : vector<8x512xf32> to vector<8x128xf32>
    %20 = arith.negf %19 : vector<8x128xf32>
    %21 = math.exp %20 : vector<8x128xf32>
    %cst_10 = arith.constant 1.000000e+00 : f32
    %22 = vector.broadcast %cst_10 : f32 to vector<8x128xf32>
    %23 = arith.addf %22, %21 : vector<8x128xf32>
    %24 = arith.divf %22, %23 : vector<8x128xf32>
    %25 = vector.extract_strided_slice %12 {offsets = [0, 256], sizes = [8, 128], strides = [1, 1]} : vector<8x512xf32> to vector<8x128xf32>
    %26 = math.tanh %25 : vector<8x128xf32>
    %27 = vector.extract_strided_slice %12 {offsets = [0, 384], sizes = [8, 128], strides = [1, 1]} : vector<8x512xf32> to vector<8x128xf32>
    %28 = arith.negf %27 : vector<8x128xf32>
    %29 = math.exp %28 : vector<8x128xf32>
    %cst_11 = arith.constant 1.000000e+00 : f32
    %30 = vector.broadcast %cst_11 : f32 to vector<8x128xf32>
    %31 = arith.addf %30, %29 : vector<8x128xf32>
    %32 = arith.divf %30, %31 : vector<8x128xf32>
    %33 = arith.mulf %24, %5 : vector<8x128xf32>
    %34 = arith.mulf %18, %26 : vector<8x128xf32>
    %35 = arith.addf %33, %34 : vector<8x128xf32>
    %36 = math.tanh %35 : vector<8x128xf32>
    %37 = arith.mulf %32, %36 : vector<8x128xf32>
    %38 = arith.truncf %37 : vector<8x128xf32> to vector<8x128xbf16>
    %39 = arith.index_cast %c0_i32_6 : i32 to index
    %c0_12 = arith.constant 0 : index
    %c0_13 = arith.constant 0 : index
    %40 = vector.load %arg4[%39, %c0_12, %c0_13] : memref<8x8x128xbf16, #tpu.memory_space<vmem>>, vector<1x8x128xbf16>
    %41 = vector.shape_cast %40 : vector<1x8x128xbf16> to vector<8x128xbf16>
    %42 = vector.shape_cast %38 : vector<8x128xbf16> to vector<1x8x128xbf16>
    tpu.vector_store %arg4[%39, %c0_12, %c0_13], %42 {strides = array<i32>} : memref<8x8x128xbf16, #tpu.memory_space<vmem>>, vector<1x8x128xbf16>,
    %c1_i32 = arith.constant 1 : i32
    %43 = arith.index_cast %c1_i32 : i32 to index
    %c0_14 = arith.constant 0 : index
    %c0_15 = arith.constant 0 : index
    %44 = vector.load %arg2[%43, %c0_14, %c0_15] : memref<8x8x512xbf16, #tpu.memory_space<vmem>>, vector<1x8x512xbf16>
    %45 = vector.shape_cast %44 : vector<1x8x512xbf16> to vector<8x512xbf16>
    %46 = arith.extf %45 : vector<8x512xbf16> to vector<8x512xf32>
    %47 = arith.truncf %37 : vector<8x128xf32> to vector<8x128xbf16>
    %cst_16 = arith.constant dense<0.000000e+00> : vector<8x512xf32>
    %48 = tpu.matmul %47, %3, %cst_16 {dimension_numbers = #tpu.dot_dimension_numbers<[1], [0], [0], [1], [0, 0, 1, 1], [], []>} : vector<8x128xbf16>, vector<128x512xbf16>, vector<8x512xf32> -> vector<8x512xf32>
    %49 = arith.addf %46, %48 : vector<8x512xf32>
    %50 = vector.extract_strided_slice %49 {offsets = [0, 0], sizes = [8, 128], strides = [1, 1]} : vector<8x512xf32> to vector<8x128xf32>
    %51 = arith.negf %50 : vector<8x128xf32>
    %52 = math.exp %51 : vector<8x128xf32>
    %cst_17 = arith.constant 1.000000e+00 : f32
    %53 = vector.broadcast %cst_17 : f32 to vector<8x128xf32>
    %54 = arith.addf %53, %52 : vector<8x128xf32>
    %55 = arith.divf %53, %54 : vector<8x128xf32>
    %56 = vector.extract_strided_slice %49 {offsets = [0, 128], sizes = [8, 128], strides = [1, 1]} : vector<8x512xf32> to vector<8x128xf32>
    %57 = arith.negf %56 : vector<8x128xf32>
    %58 = math.exp %57 : vector<8x128xf32>
    %cst_18 = arith.constant 1.000000e+00 : f32
    %59 = vector.broadcast %cst_18 : f32 to vector<8x128xf32>
    %60 = arith.addf %59, %58 : vector<8x128xf32>
    %61 = arith.divf %59, %60 : vector<8x128xf32>
    %62 = vector.extract_strided_slice %49 {offsets = [0, 256], sizes = [8, 128], strides = [1, 1]} : vector<8x512xf32> to vector<8x128xf32>
    %63 = math.tanh %62 : vector<8x128xf32>
    %64 = vector.extract_strided_slice %49 {offsets = [0, 384], sizes = [8, 128], strides = [1, 1]} : vector<8x512xf32> to vector<8x128xf32>
    %65 = arith.negf %64 : vector<8x128xf32>
    %66 = math.exp %65 : vector<8x128xf32>
    %cst_19 = arith.constant 1.000000e+00 : f32
    %67 = vector.broadcast %cst_19 : f32 to vector<8x128xf32>
    %68 = arith.addf %67, %66 : vector<8x128xf32>
    %69 = arith.divf %67, %68 : vector<8x128xf32>
    %70 = arith.mulf %61, %35 : vector<8x128xf32>
    %71 = arith.mulf %55, %63 : vector<8x128xf32>
    %72 = arith.addf %70, %71 : vector<8x128xf32>
    %73 = math.tanh %72 : vector<8x128xf32>
    %74 = arith.mulf %69, %73 : vector<8x128xf32>
    %75 = arith.truncf %74 : vector<8x128xf32> to vector<8x128xbf16>
    %76 = arith.index_cast %c1_i32 : i32 to index
    %c0_20 = arith.constant 0 : index
    %c0_21 = arith.constant 0 : index
    %77 = vector.load %arg4[%76, %c0_20, %c0_21] : memref<8x8x128xbf16, #tpu.memory_space<vmem>>, vector<1x8x128xbf16>
    %78 = vector.shape_cast %77 : vector<1x8x128xbf16> to vector<8x128xbf16>
    %79 = vector.shape_cast %75 : vector<8x128xbf16> to vector<1x8x128xbf16>
    tpu.vector_store %arg4[%76, %c0_20, %c0_21], %79 {strides = array<i32>} : memref<8x8x128xbf16, #tpu.memory_space<vmem>>, vector<1x8x128xbf16>,
    %c2_i32 = arith.constant 2 : i32
    %80 = arith.index_cast %c2_i32 : i32 to index
    %c0_22 = arith.constant 0 : index
    %c0_23 = arith.constant 0 : index
    %81 = vector.load %arg2[%80, %c0_22, %c0_23] : memref<8x8x512xbf16, #tpu.memory_space<vmem>>, vector<1x8x512xbf16>
    %82 = vector.shape_cast %81 : vector<1x8x512xbf16> to vector<8x512xbf16>
    %83 = arith.extf %82 : vector<8x512xbf16> to vector<8x512xf32>
    %84 = arith.truncf %74 : vector<8x128xf32> to vector<8x128xbf16>
    %cst_24 = arith.constant dense<0.000000e+00> : vector<8x512xf32>
    %85 = tpu.matmul %84, %3, %cst_24 {dimension_numbers = #tpu.dot_dimension_numbers<[1], [0], [0], [1], [0, 0, 1, 1], [], []>} : vector<8x128xbf16>, vector<128x512xbf16>, vector<8x512xf32> -> vector<8x512xf32>
    %86 = arith.addf %83, %85 : vector<8x512xf32>
    %87 = vector.extract_strided_slice %86 {offsets = [0, 0], sizes = [8, 128], strides = [1, 1]} : vector<8x512xf32> to vector<8x128xf32>
    %88 = arith.negf %87 : vector<8x128xf32>
    %89 = math.exp %88 : vector<8x128xf32>
    %cst_25 = arith.constant 1.000000e+00 : f32
    %90 = vector.broadcast %cst_25 : f32 to vector<8x128xf32>
    %91 = arith.addf %90, %89 : vector<8x128xf32>
    %92 = arith.divf %90, %91 : vector<8x128xf32>
    %93 = vector.extract_strided_slice %86 {offsets = [0, 128], sizes = [8, 128], strides = [1, 1]} : vector<8x512xf32> to vector<8x128xf32>
    %94 = arith.negf %93 : vector<8x128xf32>
    %95 = math.exp %94 : vector<8x128xf32>
    %cst_26 = arith.constant 1.000000e+00 : f32
    %96 = vector.broadcast %cst_26 : f32 to vector<8x128xf32>
    %97 = arith.addf %96, %95 : vector<8x128xf32>
    %98 = arith.divf %96, %97 : vector<8x128xf32>
    %99 = vector.extract_strided_slice %86 {offsets = [0, 256], sizes = [8, 128], strides = [1, 1]} : vector<8x512xf32> to vector<8x128xf32>
    %100 = math.tanh %99 : vector<8x128xf32>
    %101 = vector.extract_strided_slice %86 {offsets = [0, 384], sizes = [8, 128], strides = [1, 1]} : vector<8x512xf32> to vector<8x128xf32>
    %102 = arith.negf %101 : vector<8x128xf32>
    %103 = math.exp %102 : vector<8x128xf32>
    %cst_27 = arith.constant 1.000000e+00 : f32
    %104 = vector.broadcast %cst_27 : f32 to vector<8x128xf32>
    %105 = arith.addf %104, %103 : vector<8x128xf32>
    %106 = arith.divf %104, %105 : vector<8x128xf32>
    %107 = arith.mulf %98, %72 : vector<8x128xf32>
    %108 = arith.mulf %92, %100 : vector<8x128xf32>
    %109 = arith.addf %107, %108 : vector<8x128xf32>
    %110 = math.tanh %109 : vector<8x128xf32>
    %111 = arith.mulf %106, %110 : vector<8x128xf32>
    %112 = arith.truncf %111 : vector<8x128xf32> to vector<8x128xbf16>
    %113 = arith.index_cast %c2_i32 : i32 to index
    %c0_28 = arith.constant 0 : index
    %c0_29 = arith.constant 0 : index
    %114 = vector.load %arg4[%113, %c0_28, %c0_29] : memref<8x8x128xbf16, #tpu.memory_space<vmem>>, vector<1x8x128xbf16>
    %115 = vector.shape_cast %114 : vector<1x8x128xbf16> to vector<8x128xbf16>
    %116 = vector.shape_cast %112 : vector<8x128xbf16> to vector<1x8x128xbf16>
    tpu.vector_store %arg4[%113, %c0_28, %c0_29], %116 {strides = array<i32>} : memref<8x8x128xbf16, #tpu.memory_space<vmem>>, vector<1x8x128xbf16>,
    %c3_i32 = arith.constant 3 : i32
    %117 = arith.index_cast %c3_i32 : i32 to index
    %c0_30 = arith.constant 0 : index
    %c0_31 = arith.constant 0 : index
    %118 = vector.load %arg2[%117, %c0_30, %c0_31] : memref<8x8x512xbf16, #tpu.memory_space<vmem>>, vector<1x8x512xbf16>
    %119 = vector.shape_cast %118 : vector<1x8x512xbf16> to vector<8x512xbf16>
    %120 = arith.extf %119 : vector<8x512xbf16> to vector<8x512xf32>
    %121 = arith.truncf %111 : vector<8x128xf32> to vector<8x128xbf16>
    %cst_32 = arith.constant dense<0.000000e+00> : vector<8x512xf32>
    %122 = tpu.matmul %121, %3, %cst_32 {dimension_numbers = #tpu.dot_dimension_numbers<[1], [0], [0], [1], [0, 0, 1, 1], [], []>} : vector<8x128xbf16>, vector<128x512xbf16>, vector<8x512xf32> -> vector<8x512xf32>
    %123 = arith.addf %120, %122 : vector<8x512xf32>
    %124 = vector.extract_strided_slice %123 {offsets = [0, 0], sizes = [8, 128], strides = [1, 1]} : vector<8x512xf32> to vector<8x128xf32>
    %125 = arith.negf %124 : vector<8x128xf32>
    %126 = math.exp %125 : vector<8x128xf32>
    %cst_33 = arith.constant 1.000000e+00 : f32
    %127 = vector.broadcast %cst_33 : f32 to vector<8x128xf32>
    %128 = arith.addf %127, %126 : vector<8x128xf32>
    %129 = arith.divf %127, %128 : vector<8x128xf32>
    %130 = vector.extract_strided_slice %123 {offsets = [0, 128], sizes = [8, 128], strides = [1, 1]} : vector<8x512xf32> to vector<8x128xf32>
    %131 = arith.negf %130 : vector<8x128xf32>
    %132 = math.exp %131 : vector<8x128xf32>
    %cst_34 = arith.constant 1.000000e+00 : f32
    %133 = vector.broadcast %cst_34 : f32 to vector<8x128xf32>
    %134 = arith.addf %133, %132 : vector<8x128xf32>
    %135 = arith.divf %133, %134 : vector<8x128xf32>
    %136 = vector.extract_strided_slice %123 {offsets = [0, 256], sizes = [8, 128], strides = [1, 1]} : vector<8x512xf32> to vector<8x128xf32>
    %137 = math.tanh %136 : vector<8x128xf32>
    %138 = vector.extract_strided_slice %123 {offsets = [0, 384], sizes = [8, 128], strides = [1, 1]} : vector<8x512xf32> to vector<8x128xf32>
    %139 = arith.negf %138 : vector<8x128xf32>
    %140 = math.exp %139 : vector<8x128xf32>
    %cst_35 = arith.constant 1.000000e+00 : f32
    %141 = vector.broadcast %cst_35 : f32 to vector<8x128xf32>
    %142 = arith.addf %141, %140 : vector<8x128xf32>
    %143 = arith.divf %141, %142 : vector<8x128xf32>
    %144 = arith.mulf %135, %109 : vector<8x128xf32>
    %145 = arith.mulf %129, %137 : vector<8x128xf32>
    %146 = arith.addf %144, %145 : vector<8x128xf32>
    %147 = math.tanh %146 : vector<8x128xf32>
    %148 = arith.mulf %143, %147 : vector<8x128xf32>
    %149 = arith.truncf %148 : vector<8x128xf32> to vector<8x128xbf16>
    %150 = arith.index_cast %c3_i32 : i32 to index
    %c0_36 = arith.constant 0 : index
    %c0_37 = arith.constant 0 : index
    %151 = vector.load %arg4[%150, %c0_36, %c0_37] : memref<8x8x128xbf16, #tpu.memory_space<vmem>>, vector<1x8x128xbf16>
    %152 = vector.shape_cast %151 : vector<1x8x128xbf16> to vector<8x128xbf16>
    %153 = vector.shape_cast %149 : vector<8x128xbf16> to vector<1x8x128xbf16>
    tpu.vector_store %arg4[%150, %c0_36, %c0_37], %153 {strides = array<i32>} : memref<8x8x128xbf16, #tpu.memory_space<vmem>>, vector<1x8x128xbf16>,
    %c4_i32 = arith.constant 4 : i32
    %154 = arith.index_cast %c4_i32 : i32 to index
    %c0_38 = arith.constant 0 : index
    %c0_39 = arith.constant 0 : index
    %155 = vector.load %arg2[%154, %c0_38, %c0_39] : memref<8x8x512xbf16, #tpu.memory_space<vmem>>, vector<1x8x512xbf16>
    %156 = vector.shape_cast %155 : vector<1x8x512xbf16> to vector<8x512xbf16>
    %157 = arith.extf %156 : vector<8x512xbf16> to vector<8x512xf32>
    %158 = arith.truncf %148 : vector<8x128xf32> to vector<8x128xbf16>
    %cst_40 = arith.constant dense<0.000000e+00> : vector<8x512xf32>
    %159 = tpu.matmul %158, %3, %cst_40 {dimension_numbers = #tpu.dot_dimension_numbers<[1], [0], [0], [1], [0, 0, 1, 1], [], []>} : vector<8x128xbf16>, vector<128x512xbf16>, vector<8x512xf32> -> vector<8x512xf32>
    %160 = arith.addf %157, %159 : vector<8x512xf32>
    %161 = vector.extract_strided_slice %160 {offsets = [0, 0], sizes = [8, 128], strides = [1, 1]} : vector<8x512xf32> to vector<8x128xf32>
    %162 = arith.negf %161 : vector<8x128xf32>
    %163 = math.exp %162 : vector<8x128xf32>
    %cst_41 = arith.constant 1.000000e+00 : f32
    %164 = vector.broadcast %cst_41 : f32 to vector<8x128xf32>
    %165 = arith.addf %164, %163 : vector<8x128xf32>
    %166 = arith.divf %164, %165 : vector<8x128xf32>
    %167 = vector.extract_strided_slice %160 {offsets = [0, 128], sizes = [8, 128], strides = [1, 1]} : vector<8x512xf32> to vector<8x128xf32>
    %168 = arith.negf %167 : vector<8x128xf32>
    %169 = math.exp %168 : vector<8x128xf32>
    %cst_42 = arith.constant 1.000000e+00 : f32
    %170 = vector.broadcast %cst_42 : f32 to vector<8x128xf32>
    %171 = arith.addf %170, %169 : vector<8x128xf32>
    %172 = arith.divf %170, %171 : vector<8x128xf32>
    %173 = vector.extract_strided_slice %160 {offsets = [0, 256], sizes = [8, 128], strides = [1, 1]} : vector<8x512xf32> to vector<8x128xf32>
    %174 = math.tanh %173 : vector<8x128xf32>
    %175 = vector.extract_strided_slice %160 {offsets = [0, 384], sizes = [8, 128], strides = [1, 1]} : vector<8x512xf32> to vector<8x128xf32>
    %176 = arith.negf %175 : vector<8x128xf32>
    %177 = math.exp %176 : vector<8x128xf32>
    %cst_43 = arith.constant 1.000000e+00 : f32
    %178 = vector.broadcast %cst_43 : f32 to vector<8x128xf32>
    %179 = arith.addf %178, %177 : vector<8x128xf32>
    %180 = arith.divf %178, %179 : vector<8x128xf32>
    %181 = arith.mulf %172, %146 : vector<8x128xf32>
    %182 = arith.mulf %166, %174 : vector<8x128xf32>
    %183 = arith.addf %181, %182 : vector<8x128xf32>
    %184 = math.tanh %183 : vector<8x128xf32>
    %185 = arith.mulf %180, %184 : vector<8x128xf32>
    %186 = arith.truncf %185 : vector<8x128xf32> to vector<8x128xbf16>
    %187 = arith.index_cast %c4_i32 : i32 to index
    %c0_44 = arith.constant 0 : index
    %c0_45 = arith.constant 0 : index
    %188 = vector.load %arg4[%187, %c0_44, %c0_45] : memref<8x8x128xbf16, #tpu.memory_space<vmem>>, vector<1x8x128xbf16>
    %189 = vector.shape_cast %188 : vector<1x8x128xbf16> to vector<8x128xbf16>
    %190 = vector.shape_cast %186 : vector<8x128xbf16> to vector<1x8x128xbf16>
    tpu.vector_store %arg4[%187, %c0_44, %c0_45], %190 {strides = array<i32>} : memref<8x8x128xbf16, #tpu.memory_space<vmem>>, vector<1x8x128xbf16>,
    %c5_i32 = arith.constant 5 : i32
    %191 = arith.index_cast %c5_i32 : i32 to index
    %c0_46 = arith.constant 0 : index
    %c0_47 = arith.constant 0 : index
    %192 = vector.load %arg2[%191, %c0_46, %c0_47] : memref<8x8x512xbf16, #tpu.memory_space<vmem>>, vector<1x8x512xbf16>
    %193 = vector.shape_cast %192 : vector<1x8x512xbf16> to vector<8x512xbf16>
    %194 = arith.extf %193 : vector<8x512xbf16> to vector<8x512xf32>
    %195 = arith.truncf %185 : vector<8x128xf32> to vector<8x128xbf16>
    %cst_48 = arith.constant dense<0.000000e+00> : vector<8x512xf32>
    %196 = tpu.matmul %195, %3, %cst_48 {dimension_numbers = #tpu.dot_dimension_numbers<[1], [0], [0], [1], [0, 0, 1, 1], [], []>} : vector<8x128xbf16>, vector<128x512xbf16>, vector<8x512xf32> -> vector<8x512xf32>
    %197 = arith.addf %194, %196 : vector<8x512xf32>
    %198 = vector.extract_strided_slice %197 {offsets = [0, 0], sizes = [8, 128], strides = [1, 1]} : vector<8x512xf32> to vector<8x128xf32>
    %199 = arith.negf %198 : vector<8x128xf32>
    %200 = math.exp %199 : vector<8x128xf32>
    %cst_49 = arith.constant 1.000000e+00 : f32
    %201 = vector.broadcast %cst_49 : f32 to vector<8x128xf32>
    %202 = arith.addf %201, %200 : vector<8x128xf32>
    %203 = arith.divf %201, %202 : vector<8x128xf32>
    %204 = vector.extract_strided_slice %197 {offsets = [0, 128], sizes = [8, 128], strides = [1, 1]} : vector<8x512xf32> to vector<8x128xf32>
    %205 = arith.negf %204 : vector<8x128xf32>
    %206 = math.exp %205 : vector<8x128xf32>
    %cst_50 = arith.constant 1.000000e+00 : f32
    %207 = vector.broadcast %cst_50 : f32 to vector<8x128xf32>
    %208 = arith.addf %207, %206 : vector<8x128xf32>
    %209 = arith.divf %207, %208 : vector<8x128xf32>
    %210 = vector.extract_strided_slice %197 {offsets = [0, 256], sizes = [8, 128], strides = [1, 1]} : vector<8x512xf32> to vector<8x128xf32>
    %211 = math.tanh %210 : vector<8x128xf32>
    %212 = vector.extract_strided_slice %197 {offsets = [0, 384], sizes = [8, 128], strides = [1, 1]} : vector<8x512xf32> to vector<8x128xf32>
    %213 = arith.negf %212 : vector<8x128xf32>
    %214 = math.exp %213 : vector<8x128xf32>
    %cst_51 = arith.constant 1.000000e+00 : f32
    %215 = vector.broadcast %cst_51 : f32 to vector<8x128xf32>
    %216 = arith.addf %215, %214 : vector<8x128xf32>
    %217 = arith.divf %215, %216 : vector<8x128xf32>
    %218 = arith.mulf %209, %183 : vector<8x128xf32>
    %219 = arith.mulf %203, %211 : vector<8x128xf32>
    %220 = arith.addf %218, %219 : vector<8x128xf32>
    %221 = math.tanh %220 : vector<8x128xf32>
    %222 = arith.mulf %217, %221 : vector<8x128xf32>
    %223 = arith.truncf %222 : vector<8x128xf32> to vector<8x128xbf16>
    %224 = arith.index_cast %c5_i32 : i32 to index
    %c0_52 = arith.constant 0 : index
    %c0_53 = arith.constant 0 : index
    %225 = vector.load %arg4[%224, %c0_52, %c0_53] : memref<8x8x128xbf16, #tpu.memory_space<vmem>>, vector<1x8x128xbf16>
    %226 = vector.shape_cast %225 : vector<1x8x128xbf16> to vector<8x128xbf16>
    %227 = vector.shape_cast %223 : vector<8x128xbf16> to vector<1x8x128xbf16>
    tpu.vector_store %arg4[%224, %c0_52, %c0_53], %227 {strides = array<i32>} : memref<8x8x128xbf16, #tpu.memory_space<vmem>>, vector<1x8x128xbf16>,
    %c6_i32 = arith.constant 6 : i32
    %228 = arith.index_cast %c6_i32 : i32 to index
    %c0_54 = arith.constant 0 : index
    %c0_55 = arith.constant 0 : index
    %229 = vector.load %arg2[%228, %c0_54, %c0_55] : memref<8x8x512xbf16, #tpu.memory_space<vmem>>, vector<1x8x512xbf16>
    %230 = vector.shape_cast %229 : vector<1x8x512xbf16> to vector<8x512xbf16>
    %231 = arith.extf %230 : vector<8x512xbf16> to vector<8x512xf32>
    %232 = arith.truncf %222 : vector<8x128xf32> to vector<8x128xbf16>
    %cst_56 = arith.constant dense<0.000000e+00> : vector<8x512xf32>
    %233 = tpu.matmul %232, %3, %cst_56 {dimension_numbers = #tpu.dot_dimension_numbers<[1], [0], [0], [1], [0, 0, 1, 1], [], []>} : vector<8x128xbf16>, vector<128x512xbf16>, vector<8x512xf32> -> vector<8x512xf32>
    %234 = arith.addf %231, %233 : vector<8x512xf32>
    %235 = vector.extract_strided_slice %234 {offsets = [0, 0], sizes = [8, 128], strides = [1, 1]} : vector<8x512xf32> to vector<8x128xf32>
    %236 = arith.negf %235 : vector<8x128xf32>
    %237 = math.exp %236 : vector<8x128xf32>
    %cst_57 = arith.constant 1.000000e+00 : f32
    %238 = vector.broadcast %cst_57 : f32 to vector<8x128xf32>
    %239 = arith.addf %238, %237 : vector<8x128xf32>
    %240 = arith.divf %238, %239 : vector<8x128xf32>
    %241 = vector.extract_strided_slice %234 {offsets = [0, 128], sizes = [8, 128], strides = [1, 1]} : vector<8x512xf32> to vector<8x128xf32>
    %242 = arith.negf %241 : vector<8x128xf32>
    %243 = math.exp %242 : vector<8x128xf32>
    %cst_58 = arith.constant 1.000000e+00 : f32
    %244 = vector.broadcast %cst_58 : f32 to vector<8x128xf32>
    %245 = arith.addf %244, %243 : vector<8x128xf32>
    %246 = arith.divf %244, %245 : vector<8x128xf32>
    %247 = vector.extract_strided_slice %234 {offsets = [0, 256], sizes = [8, 128], strides = [1, 1]} : vector<8x512xf32> to vector<8x128xf32>
    %248 = math.tanh %247 : vector<8x128xf32>
    %249 = vector.extract_strided_slice %234 {offsets = [0, 384], sizes = [8, 128], strides = [1, 1]} : vector<8x512xf32> to vector<8x128xf32>
    %250 = arith.negf %249 : vector<8x128xf32>
    %251 = math.exp %250 : vector<8x128xf32>
    %cst_59 = arith.constant 1.000000e+00 : f32
    %252 = vector.broadcast %cst_59 : f32 to vector<8x128xf32>
    %253 = arith.addf %252, %251 : vector<8x128xf32>
    %254 = arith.divf %252, %253 : vector<8x128xf32>
    %255 = arith.mulf %246, %220 : vector<8x128xf32>
    %256 = arith.mulf %240, %248 : vector<8x128xf32>
    %257 = arith.addf %255, %256 : vector<8x128xf32>
    %258 = math.tanh %257 : vector<8x128xf32>
    %259 = arith.mulf %254, %258 : vector<8x128xf32>
    %260 = arith.truncf %259 : vector<8x128xf32> to vector<8x128xbf16>
    %261 = arith.index_cast %c6_i32 : i32 to index
    %c0_60 = arith.constant 0 : index
    %c0_61 = arith.constant 0 : index
    %262 = vector.load %arg4[%261, %c0_60, %c0_61] : memref<8x8x128xbf16, #tpu.memory_space<vmem>>, vector<1x8x128xbf16>
    %263 = vector.shape_cast %262 : vector<1x8x128xbf16> to vector<8x128xbf16>
    %264 = vector.shape_cast %260 : vector<8x128xbf16> to vector<1x8x128xbf16>
    tpu.vector_store %arg4[%261, %c0_60, %c0_61], %264 {strides = array<i32>} : memref<8x8x128xbf16, #tpu.memory_space<vmem>>, vector<1x8x128xbf16>,
    %c7_i32 = arith.constant 7 : i32
    %265 = arith.index_cast %c7_i32 : i32 to index
    %c0_62 = arith.constant 0 : index
    %c0_63 = arith.constant 0 : index
    %266 = vector.load %arg2[%265, %c0_62, %c0_63] : memref<8x8x512xbf16, #tpu.memory_space<vmem>>, vector<1x8x512xbf16>
    %267 = vector.shape_cast %266 : vector<1x8x512xbf16> to vector<8x512xbf16>
    %268 = arith.extf %267 : vector<8x512xbf16> to vector<8x512xf32>
    %269 = arith.truncf %259 : vector<8x128xf32> to vector<8x128xbf16>
    %cst_64 = arith.constant dense<0.000000e+00> : vector<8x512xf32>
    %270 = tpu.matmul %269, %3, %cst_64 {dimension_numbers = #tpu.dot_dimension_numbers<[1], [0], [0], [1], [0, 0, 1, 1], [], []>} : vector<8x128xbf16>, vector<128x512xbf16>, vector<8x512xf32> -> vector<8x512xf32>
    %271 = arith.addf %268, %270 : vector<8x512xf32>
    %272 = vector.extract_strided_slice %271 {offsets = [0, 0], sizes = [8, 128], strides = [1, 1]} : vector<8x512xf32> to vector<8x128xf32>
    %273 = arith.negf %272 : vector<8x128xf32>
    %274 = math.exp %273 : vector<8x128xf32>
    %cst_65 = arith.constant 1.000000e+00 : f32
    %275 = vector.broadcast %cst_65 : f32 to vector<8x128xf32>
    %276 = arith.addf %275, %274 : vector<8x128xf32>
    %277 = arith.divf %275, %276 : vector<8x128xf32>
    %278 = vector.extract_strided_slice %271 {offsets = [0, 128], sizes = [8, 128], strides = [1, 1]} : vector<8x512xf32> to vector<8x128xf32>
    %279 = arith.negf %278 : vector<8x128xf32>
    %280 = math.exp %279 : vector<8x128xf32>
    %cst_66 = arith.constant 1.000000e+00 : f32
    %281 = vector.broadcast %cst_66 : f32 to vector<8x128xf32>
    %282 = arith.addf %281, %280 : vector<8x128xf32>
    %283 = arith.divf %281, %282 : vector<8x128xf32>
    %284 = vector.extract_strided_slice %271 {offsets = [0, 256], sizes = [8, 128], strides = [1, 1]} : vector<8x512xf32> to vector<8x128xf32>
    %285 = math.tanh %284 : vector<8x128xf32>
    %286 = vector.extract_strided_slice %271 {offsets = [0, 384], sizes = [8, 128], strides = [1, 1]} : vector<8x512xf32> to vector<8x128xf32>
    %287 = arith.negf %286 : vector<8x128xf32>
    %288 = math.exp %287 : vector<8x128xf32>
    %cst_67 = arith.constant 1.000000e+00 : f32
    %289 = vector.broadcast %cst_67 : f32 to vector<8x128xf32>
    %290 = arith.addf %289, %288 : vector<8x128xf32>
    %291 = arith.divf %289, %290 : vector<8x128xf32>
    %292 = arith.mulf %283, %257 : vector<8x128xf32>
    %293 = arith.mulf %277, %285 : vector<8x128xf32>
    %294 = arith.addf %292, %293 : vector<8x128xf32>
    %295 = math.tanh %294 : vector<8x128xf32>
    %296 = arith.mulf %291, %295 : vector<8x128xf32>
    %297 = arith.truncf %296 : vector<8x128xf32> to vector<8x128xbf16>
    %298 = arith.index_cast %c7_i32 : i32 to index
    %c0_68 = arith.constant 0 : index
    %c0_69 = arith.constant 0 : index
    %299 = vector.load %arg4[%298, %c0_68, %c0_69] : memref<8x8x128xbf16, #tpu.memory_space<vmem>>, vector<1x8x128xbf16>
    %300 = vector.shape_cast %299 : vector<1x8x128xbf16> to vector<8x128xbf16>
    %301 = vector.shape_cast %297 : vector<8x128xbf16> to vector<1x8x128xbf16>
    tpu.vector_store %arg4[%298, %c0_68, %c0_69], %301 {strides = array<i32>} : memref<8x8x128xbf16, #tpu.memory_space<vmem>>, vector<1x8x128xbf16>,
    %c8_i32 = arith.constant 8 : i32
    %c0_70 = arith.constant 0 : index
    %c0_71 = arith.constant 0 : index
    %302 = vector.load %arg5[%c0_70, %c0_71] : memref<8x128xf32, #tpu.memory_space<vmem>>, vector<8x128xf32>
    tpu.vector_store %arg5[%c0_70, %c0_71], %296 {strides = array<i32>} : memref<8x128xf32, #tpu.memory_space<vmem>>, vector<8x128xf32>,
    %c0_72 = arith.constant 0 : index
    %c0_73 = arith.constant 0 : index
    %303 = vector.load %arg6[%c0_72, %c0_73] : memref<8x128xf32, #tpu.memory_space<vmem>>, vector<8x128xf32>
    tpu.vector_store %arg6[%c0_72, %c0_73], %294 {strides = array<i32>} : memref<8x128xf32, #tpu.memory_space<vmem>>, vector<8x128xf32>,
    return
  }
  func.func @transform_0(%arg0: i32, %arg1: i32) -> (i32, i32, i32) {
    %c0_i32 = arith.constant 0 : i32
    %c0_i32_0 = arith.constant 0 : i32
    return %arg1, %arg0, %c0_i32 : i32, i32, i32
  }
  func.func @transform_1(%arg0: i32, %arg1: i32) -> (i32, i32) {
    %c0_i32 = arith.constant 0 : i32
    %c0_i32_0 = arith.constant 0 : i32
    %c0_i32_1 = arith.constant 0 : i32
    return %c0_i32, %c0_i32_0 : i32, i32
  }
  func.func @transform_2(%arg0: i32, %arg1: i32) -> (i32, i32, i32) {
    %c0_i32 = arith.constant 0 : i32
    %c0_i32_0 = arith.constant 0 : i32
    return %arg1, %arg0, %c0_i32 : i32, i32, i32
  }
}

module attributes {stable_mosaic.version = 11 : i64} {
  func.func @_matmul_bias_kernel(%arg0: i32, %arg1: i32, %arg2: i32, %arg3: memref<32x128xbf16, #tpu.memory_space<vmem>>, %arg4: memref<128x128xbf16, #tpu.memory_space<vmem>>, %arg5: memref<1x128xf32, #tpu.memory_space<vmem>>, %arg6: memref<32x128xf32, #tpu.memory_space<vmem>>, %arg7: memref<32x128xf32, #tpu.memory_space<vmem>>) attributes {dimension_semantics = [#tpu.dimension_semantics<parallel>, #tpu.dimension_semantics<parallel>, #tpu.dimension_semantics<arbitrary>], iteration_bounds = array<i64: 1, 1, 1>, scalar_prefetch = 0 : i64, scratch_operands = 1 : i64, tpu.core_type = #tpu.core_type<tc>, window_params = [{transform_indices = @transform_0, window_bounds = array<i64: 32, 128>}, {transform_indices = @transform_1, window_bounds = array<i64: 128, 128>}, {transform_indices = @transform_2, window_bounds = array<i64: 1, 128>}, {transform_indices = @transform_3, window_bounds = array<i64: 32, 128>}]} {
    %c0_i32 = arith.constant 0 : i32
    %0 = arith.cmpi eq, %arg2, %c0_i32 : i32
    %1 = arith.extui %0 : i1 to i32
    %c0_i32_0 = arith.constant 0 : i32
    %2 = arith.cmpi ne, %1, %c0_i32_0 : i32
    scf.if %2 {
      %cst_10 = arith.constant 0.000000e+00 : f32
      %12 = vector.broadcast %cst_10 : f32 to vector<32x128xf32>
      %c0_11 = arith.constant 0 : index
      %c0_12 = arith.constant 0 : index
      %13 = vector.load %arg7[%c0_11, %c0_12] : memref<32x128xf32, #tpu.memory_space<vmem>>, vector<32x128xf32>
      tpu.vector_store %arg7[%c0_11, %c0_12], %12 {strides = array<i32>} : memref<32x128xf32, #tpu.memory_space<vmem>>, vector<32x128xf32>,
    } else {
    }
    %c0 = arith.constant 0 : index
    %c0_1 = arith.constant 0 : index
    %3 = vector.load %arg7[%c0, %c0_1] : memref<32x128xf32, #tpu.memory_space<vmem>>, vector<32x128xf32>
    %c0_2 = arith.constant 0 : index
    %c0_3 = arith.constant 0 : index
    %4 = vector.load %arg3[%c0_2, %c0_3] : memref<32x128xbf16, #tpu.memory_space<vmem>>, vector<32x128xbf16>
    %c0_4 = arith.constant 0 : index
    %c0_5 = arith.constant 0 : index
    %5 = vector.load %arg4[%c0_4, %c0_5] : memref<128x128xbf16, #tpu.memory_space<vmem>>, vector<128x128xbf16>
    %cst = arith.constant dense<0.000000e+00> : vector<32x128xf32>
    %6 = tpu.matmul %4, %5, %cst {dimension_numbers = #tpu.dot_dimension_numbers<[1], [0], [0], [1], [0, 0, 1, 1], [], []>} : vector<32x128xbf16>, vector<128x128xbf16>, vector<32x128xf32> -> vector<32x128xf32>
    %7 = arith.addf %3, %6 : vector<32x128xf32>
    %c0_6 = arith.constant 0 : index
    %c0_7 = arith.constant 0 : index
    %8 = vector.load %arg7[%c0_6, %c0_7] : memref<32x128xf32, #tpu.memory_space<vmem>>, vector<32x128xf32>
    tpu.vector_store %arg7[%c0_6, %c0_7], %7 {strides = array<i32>} : memref<32x128xf32, #tpu.memory_space<vmem>>, vector<32x128xf32>,
    %c0_i32_8 = arith.constant 0 : i32
    %9 = arith.cmpi eq, %arg2, %c0_i32_8 : i32
    %10 = arith.extui %9 : i1 to i32
    %c0_i32_9 = arith.constant 0 : i32
    %11 = arith.cmpi ne, %10, %c0_i32_9 : i32
    scf.if %11 {
      %c0_10 = arith.constant 0 : index
      %c0_11 = arith.constant 0 : index
      %12 = vector.load %arg7[%c0_10, %c0_11] : memref<32x128xf32, #tpu.memory_space<vmem>>, vector<32x128xf32>
      %c0_12 = arith.constant 0 : index
      %c0_13 = arith.constant 0 : index
      %13 = vector.load %arg5[%c0_12, %c0_13] : memref<1x128xf32, #tpu.memory_space<vmem>>, vector<1x128xf32>
      %14 = vector.broadcast %13 : vector<1x128xf32> to vector<32x128xf32>
      %15 = arith.addf %12, %14 : vector<32x128xf32>
      %c0_14 = arith.constant 0 : index
      %c0_15 = arith.constant 0 : index
      %16 = vector.load %arg6[%c0_14, %c0_15] : memref<32x128xf32, #tpu.memory_space<vmem>>, vector<32x128xf32>
      tpu.vector_store %arg6[%c0_14, %c0_15], %15 {strides = array<i32>} : memref<32x128xf32, #tpu.memory_space<vmem>>, vector<32x128xf32>,
    } else {
    }
    return
  }
  func.func @transform_0(%arg0: i32, %arg1: i32, %arg2: i32) -> (i32, i32) {
    %c0_i32 = arith.constant 0 : i32
    return %arg0, %arg2 : i32, i32
  }
  func.func @transform_1(%arg0: i32, %arg1: i32, %arg2: i32) -> (i32, i32) {
    %c0_i32 = arith.constant 0 : i32
    return %arg2, %arg1 : i32, i32
  }
  func.func @transform_2(%arg0: i32, %arg1: i32, %arg2: i32) -> (i32, i32) {
    %c0_i32 = arith.constant 0 : i32
    %c0_i32_0 = arith.constant 0 : i32
    return %c0_i32, %arg1 : i32, i32
  }
  func.func @transform_3(%arg0: i32, %arg1: i32, %arg2: i32) -> (i32, i32) {
    %c0_i32 = arith.constant 0 : i32
    return %arg0, %arg1 : i32, i32
  }
}

</mosaic_0001>

<llo_original>
// kernel: rnn_lm_forward.5
$region0: #{rnn_lm_forward.5}
  #allocation0 [shape = 'u32[]', space=smem, size = 0x4, offset = 0x4, fixed_abs, tag = 'smem constant byte address 0x4 - core index']
  #allocation1 [shape = 'u32[144,128]{1,0:T(1,128)}', space=vmem, size = 0x12000, scoped, tag = 'internal scratch']
  #allocation2 [shape = 'f32[32,128]{1,0:T(8,128)}', space=vmem, size = 0x4000, scoped, tag = 'scratch operand']
  %s0 = inlined_call_operand.hbm [shape: bf16[32,128], index: 0, kind: input, shape index: {}]
  %s1 = inlined_call_operand.hbm [shape: bf16[128,128], index: 1, kind: input, shape index: {}]
  %s2 = inlined_call_operand.hbm [shape: f32[1,128], index: 2, kind: input, shape index: {}]
  %s3 = inlined_call_operand.hbm [shape: f32[32,128], index: 3, kind: output, shape index: {}]
  %s4 = sld [smem:[#allocation0]]
  $region42: #{rnn_lm_forward.5} parent=0
    _
  %s6 = ssub.s32 1, %s4
  %s7 = scalar_select 0, %s6, %s4
  $region1: #{rnn_lm_forward.5} parent=0
    #allocation3 [shape = 'u8[8192]{0}', space=vmem, size = 0x2000, scoped, tag = 'input window, operand 0, single buffered']
    #allocation4 [shape = 's32[1]{0}', space=sflag, size = 0x4, scoped, tag = 'scoped memory for rnn_lm_forward.5']
    #allocation5 [shape = 's32[1]{0}', space=sflag, size = 0x4, scoped, tag = 'scoped memory for rnn_lm_forward.5']
    #allocation6 [shape = 'u8[32768]{0}', space=vmem, size = 0x8000, scoped, tag = 'input window, operand 1, single buffered']
    #allocation7 [shape = 's32[1]{0}', space=sflag, size = 0x4, scoped, tag = 'scoped memory for rnn_lm_forward.5']
    #allocation8 [shape = 'u8[512]{0}', space=vmem, size = 0x400, scoped, tag = 'input window, operand 2, single buffered']
    #allocation9 [shape = 'u8[16384]{0}', space=vmem, size = 0x4000, scoped, tag = 'output window, operand 0, single buffered']
    %8 = vsyncpa [#allocation4], 0
    %9 = vsyncpa [#allocation7], 0
    %10 = vsyncpa [#allocation5], 0
    // Predicated region
    $region2: #{rnn_lm_forward.5} parent=1 // pred_check
      _
    $region3: #{rnn_lm_forward.5} parent=1 // pred_check_branch
      %12 = sbr.rel (0) target = $region5
    $region4: #{rnn_lm_forward.5} parent=1 // pred_region
      %s14 = ssub.s32 256, 256
      %15 = vsyncadd [#allocation4], %s14
      %s16 = sshll.u32 [#allocation3], 4
      %s17 = int_to_ptr.vmem [resolvable:$true] %s16
      %22 = dma.hbm_to_vmem [thread:$0]  %s0, 256, %s17, [#allocation4], 64, 64, 4
    $region5: #{rnn_lm_forward.5} parent=1 // pred_fallthru
      _
    // Predicated region
    $region6: #{rnn_lm_forward.5} parent=1 // pred_check
      _
    $region7: #{rnn_lm_forward.5} parent=1 // pred_check_branch
      %24 = sbr.rel (0) target = $region9
    $region8: #{rnn_lm_forward.5} parent=1 // pred_region
      %s26 = ssub.s32 1024, 1024
      %27 = vsyncadd [#allocation7], %s26
      %s28 = sshll.u32 [#allocation6], 4
      %s29 = int_to_ptr.vmem [resolvable:$true] %s28
      %34 = dma.hbm_to_vmem [thread:$0]  %s1, 1024, %s29, [#allocation7], 64, 64, 4
    $region9: #{rnn_lm_forward.5} parent=1 // pred_fallthru
      _
    // Predicated region
    $region10: #{rnn_lm_forward.5} parent=1 // pred_check
      _
    $region11: #{rnn_lm_forward.5} parent=1 // pred_check_branch
      %36 = sbr.rel (0) target = $region13
    $region12: #{rnn_lm_forward.5} parent=1 // pred_region
      %s38 = ssub.s32 16, 16
      %39 = vsyncadd [#allocation7], %s38
      %s41 = sshll.u32 [#allocation8], 4
      %s42 = int_to_ptr.vmem [resolvable:$true] %s41
      %44 = dma.hbm_to_vmem [thread:$0]  %s2, 16, %s42, [#allocation7]
    $region13: #{rnn_lm_forward.5} parent=1 // pred_fallthru
      _
    // Predicated region
    $region14: #{rnn_lm_forward.5} parent=1 // pred_check
      _
    $region15: #{rnn_lm_forward.5} parent=1 // pred_check_branch
      %46 = sbr.rel (0) target = $region17
    $region16: #{rnn_lm_forward.5} parent=1 // pred_region
      %47 = dma.done [#allocation4], 256
    $region17: #{rnn_lm_forward.5} parent=1 // pred_fallthru
      _
    // Predicated region
    $region18: #{rnn_lm_forward.5} parent=1 // pred_check
      _
    $region19: #{rnn_lm_forward.5} parent=1 // pred_check_branch
      %49 = sbr.rel (0) target = $region21
    $region20: #{rnn_lm_forward.5} parent=1 // pred_region
      %50 = dma.done [#allocation7], 1024
    $region21: #{rnn_lm_forward.5} parent=1 // pred_fallthru
      _
    // Predicated region
    $region22: #{rnn_lm_forward.5} parent=1 // pred_check
      _
    $region23: #{rnn_lm_forward.5} parent=1 // pred_check_branch
      %52 = sbr.rel (0) target = $region25
    $region24: #{rnn_lm_forward.5} parent=1 // pred_region
      %53 = dma.done [#allocation7], 16
    $region25: #{rnn_lm_forward.5} parent=1 // pred_fallthru
      _
    %p55 = scmp.eq.s32.totalorder 0, 0
    // Predicated region
    $region26: #{rnn_lm_forward.5} parent=1 // pred_check
      %p56 = pneg %p55
    $region27: #{rnn_lm_forward.5} parent=1 // pred_check_branch
      %58 = sbr.rel (%p56) target = $region29
    $region28: #{rnn_lm_forward.5} parent=1 // pred_region
      %59 = vst [vmem:[#allocation2] sm:$0xff] 0.0
      %60 = vst [vmem:[#allocation2 + $0x8] sm:$0xff] 0.0
      %61 = vst [vmem:[#allocation2 + $0x10] sm:$0xff] 0.0
      %62 = vst [vmem:[#allocation2 + $0x18] sm:$0xff] 0.0
    $region29: #{rnn_lm_forward.5} parent=1 // pred_fallthru
      _
    %v63 = vld [vmem:[#allocation2] sm:$0xff]
    %v64 = vld [vmem:[#allocation2 + $0x8] sm:$0xff]
    %v65 = vld [vmem:[#allocation2 + $0x10] sm:$0xff]
    %v66 = vld [vmem:[#allocation2 + $0x18] sm:$0xff]
    %v67 = vld [vmem:[#allocation3] sm:$0xf]
    %v68 = vld [vmem:[#allocation3 + $0x4] sm:$0xf]
    %v69 = vld [vmem:[#allocation3 + $0x8] sm:$0xf]
    %v70 = vld [vmem:[#allocation3 + $0xc] sm:$0xf]
    %v71 = vld [vmem:[#allocation6] sm:$0xf]
    %v72 = vld [vmem:[#allocation6 + $0x4] sm:$0xf]
    %v73 = vld [vmem:[#allocation6 + $0x8] sm:$0xf]
    %v74 = vld [vmem:[#allocation6 + $0xc] sm:$0xf]
    %v75 = vld [vmem:[#allocation6 + $0x10] sm:$0xf]
    %v76 = vld [vmem:[#allocation6 + $0x14] sm:$0xf]
    %v77 = vld [vmem:[#allocation6 + $0x18] sm:$0xf]
    %v78 = vld [vmem:[#allocation6 + $0x1c] sm:$0xf]
    %v79 = vld [vmem:[#allocation6 + $0x20] sm:$0xf]
    %v80 = vld [vmem:[#allocation6 + $0x24] sm:$0xf]
    %v81 = vld [vmem:[#allocation6 + $0x28] sm:$0xf]
    %v82 = vld [vmem:[#allocation6 + $0x2c] sm:$0xf]
    %v83 = vld [vmem:[#allocation6 + $0x30] sm:$0xf]
    %v84 = vld [vmem:[#allocation6 + $0x34] sm:$0xf]
    %v85 = vld [vmem:[#allocation6 + $0x38] sm:$0xf]
    %v86 = vld [vmem:[#allocation6 + $0x3c] sm:$0xf]
    %v91 = vunpack.c.l.b16 %v67
    %v92 = vunpack.c.l.b16 %v68
    %v93 = vunpack.c.l.b16 %v69
    %v94 = vunpack.c.l.b16 %v70
    %v95 = vpack.c.b16 %v92, %v91
    %v96 = vpack.c.b16 %v94, %v93
    %v115 = vunpack.c.l.b16 %v71
    %v116 = vunpack.c.l.b16 %v72
    %v117 = vunpack.c.l.b16 %v73
    %v118 = vunpack.c.l.b16 %v74
    %v119 = vunpack.c.l.b16 %v75
    %v120 = vunpack.c.l.b16 %v76
    %v121 = vunpack.c.l.b16 %v77
    %v122 = vunpack.c.l.b16 %v78
    %v123 = vunpack.c.l.b16 %v79
    %v124 = vunpack.c.l.b16 %v80
    %v125 = vunpack.c.l.b16 %v81
    %v126 = vunpack.c.l.b16 %v82
    %v127 = vunpack.c.l.b16 %v83
    %v128 = vunpack.c.l.b16 %v84
    %v129 = vunpack.c.l.b16 %v85
    %v130 = vunpack.c.l.b16 %v86
    %v131 = vpack.c.b16 %v116, %v115
    %v132 = vpack.c.b16 %v118, %v117
    %v133 = vpack.c.b16 %v120, %v119
    %v134 = vpack.c.b16 %v122, %v121
    %v135 = vpack.c.b16 %v124, %v123
    %v136 = vpack.c.b16 %v126, %v125
    %v137 = vpack.c.b16 %v128, %v127
    %v138 = vpack.c.b16 %v130, %v129
    %147 = vmatprep.subr.bf16.mxu0 0
    %148 = vmatpush1.bf16.msra.mxu0 %v131
    %149 = vmatprep.subr.bf16.mxu0 0
    %150 = vmatpush1.bf16.msra.mxu0 %v132
    %151 = vmatprep.subr.bf16.mxu0 0
    %152 = vmatpush1.bf16.msra.mxu0 %v133
    %153 = vmatprep.subr.bf16.mxu0 0
    %154 = vmatpush1.bf16.msra.mxu0 %v134
    %155 = vmatprep.subr.bf16.mxu0 0
    %156 = vmatpush1.bf16.msra.mxu0 %v135
    %157 = vmatprep.subr.bf16.mxu0 0
    %158 = vmatpush1.bf16.msra.mxu0 %v136
    %159 = vmatprep.subr.bf16.mxu0 0
    %160 = vmatpush1.bf16.msra.mxu0 %v137
    %161 = vmatprep.subr.bf16.mxu0 0
    %162 = vmatpush1.bf16.msra.mxu0 %v138
    %163 = vmatprep.subr.bf16.mxu0 0
    %164 = vmatpush1.bf16.msra.mxu0 0
    %165 = vmatprep.subr.bf16.mxu0 0
    %166 = vmatpush1.bf16.msra.mxu0 0
    %167 = vmatprep.subr.bf16.mxu0 0
    %168 = vmatpush1.bf16.msra.mxu0 0
    %169 = vmatprep.subr.bf16.mxu0 0
    %170 = vmatpush1.bf16.msra.mxu0 0
    %171 = vmatprep.subr.bf16.mxu0 0
    %172 = vmatpush1.bf16.msra.mxu0 0
    %173 = vmatprep.subr.bf16.mxu0 0
    %174 = vmatpush1.bf16.msra.mxu0 0
    %175 = vmatprep.subr.bf16.mxu0 0
    %176 = vmatpush1.bf16.msra.mxu0 0
    %177 = vmatprep.subr.bf16.mxu0 0
    %178 = vmatpush1.bf16.msra.mxu0 0
    %179 = vmatprep.mubr.bf16.mxu0 0
    %180 = vmatmul.mubr.bf16.gmra.mrb[0].mxu0 %v95
    %v181 = vpop.f32.mrb[0].mxu0
    %v182 = vadd.f32 0.0, %v181
    %v183 = vpop.f32.mrb[0].mxu0
    %v184 = vpop.f32.mrb[0].mxu0
    %v185 = vadd.f32 0.0, %v184
    %v186 = vpop.f32.mrb[0].mxu0
    %187 = vmatprep.mubr.bf16.mxu0 0
    %188 = vmatmul.mubr.bf16.gmra.mrb[0].mxu0 %v96
    %v189 = vpop.f32.mrb[0].mxu0
    %v190 = vadd.f32 0.0, %v189
    %v191 = vpop.f32.mrb[0].mxu0
    %v192 = vpop.f32.mrb[0].mxu0
    %v193 = vadd.f32 0.0, %v192
    %v194 = vpop.f32.mrb[0].mxu0
    %195 = vdwg.mxu0
    %v196 = vadd.f32 %v63, %v182
    %v197 = vadd.f32 %v64, %v185
    %v198 = vadd.f32 %v65, %v190
    %v199 = vadd.f32 %v66, %v193
    %200 = vst [vmem:[#allocation2] sm:$0xff] %v196
    %201 = vst [vmem:[#allocation2 + $0x8] sm:$0xff] %v197
    %202 = vst [vmem:[#allocation2 + $0x10] sm:$0xff] %v198
    %203 = vst [vmem:[#allocation2 + $0x18] sm:$0xff] %v199
    // Predicated region
    $region30: #{rnn_lm_forward.5} parent=1 // pred_check
      %p204 = pneg %p55
    $region31: #{rnn_lm_forward.5} parent=1 // pred_check_branch
      %206 = sbr.rel (%p204) target = $region33
    $region32: #{rnn_lm_forward.5} parent=1 // pred_region
      %v207 = vld [vmem:[#allocation2] sm:$0xff]
      %v208 = vld [vmem:[#allocation2 + $0x8] sm:$0xff]
      %v209 = vld [vmem:[#allocation2 + $0x10] sm:$0xff]
      %v210 = vld [vmem:[#allocation2 + $0x18] sm:$0xff]
      %v211 = vld [vmem:[#allocation8] sm:$0x1]
      %v213 = vlaneseq
      %v214 = vshrl.u32 %v213, 7
      %v215 = vsub.s32 0, %v214
      %v216 = vrot.slane %v211, %v215
      %v218 = vadd.f32 %v207, %v216
      %v219 = vadd.f32 %v208, %v216
      %v220 = vadd.f32 %v209, %v216
      %v221 = vadd.f32 %v210, %v216
      %222 = vst [vmem:[#allocation9] sm:$0xff] %v218
      %223 = vst [vmem:[#allocation9 + $0x8] sm:$0xff] %v219
      %224 = vst [vmem:[#allocation9 + $0x10] sm:$0xff] %v220
      %225 = vst [vmem:[#allocation9 + $0x18] sm:$0xff] %v221
    $region33: #{rnn_lm_forward.5} parent=1 // pred_fallthru
      _
    // Predicated region
    $region34: #{rnn_lm_forward.5} parent=1 // pred_check
      _
    $region35: #{rnn_lm_forward.5} parent=1 // pred_check_branch
      %227 = sbr.rel (0) target = $region37
    $region36: #{rnn_lm_forward.5} parent=1 // pred_region
      %s229 = ssub.s32 512, 512
      %230 = vsyncadd [#allocation5], %s229
      %s231 = sshll.u32 [#allocation9], 4
      %s232 = int_to_ptr.vmem [resolvable:$true] %s231
      %237 = dma.vmem_to_hbm [thread:$0]  %s232, 512, %s3, [#allocation5], 128, 128, 8
    $region37: #{rnn_lm_forward.5} parent=1 // pred_fallthru
      _
    // Predicated region
    $region38: #{rnn_lm_forward.5} parent=1 // pred_check
      _
    $region39: #{rnn_lm_forward.5} parent=1 // pred_check_branch
      %239 = sbr.rel (0) target = $region41
    $region40: #{rnn_lm_forward.5} parent=1 // pred_region
      %240 = dma.done [#allocation5], 512
    $region41: #{rnn_lm_forward.5} parent=1 // pred_fallthru
      _
    %241 = vsyncpa [#allocation4], 1
    %242 = vsyncpa [#allocation7], 1
    %243 = vsyncpa [#allocation5], 1

// kernel: rnn_lm_forward.3
$region0: #{rnn_lm_forward.3}
  #allocation0 [shape = 'u32[]', space=smem, size = 0x4, offset = 0x4, fixed_abs, tag = 'smem constant byte address 0x4 - core index']
  #allocation1 [shape = 'u32[144,128]{1,0:T(1,128)}', space=vmem, size = 0x12000, scoped, tag = 'internal scratch']
  #allocation2 [shape = 'f32[32,256]{1,0:T(8,128)}', space=vmem, size = 0x8000, scoped, tag = 'scratch operand']
  %s0 = inlined_call_operand.hbm [shape: bf16[32,128], index: 0, kind: input, shape index: {}]
  %s1 = inlined_call_operand.hbm [shape: bf16[128,512], index: 1, kind: input, shape index: {}]
  %s2 = inlined_call_operand.hbm [shape: f32[1,512], index: 2, kind: input, shape index: {}]
  %s3 = inlined_call_operand.hbm [shape: bf16[32,512], index: 3, kind: output, shape index: {}]
  %s4 = sld [smem:[#allocation0]]
  $region65: #{rnn_lm_forward.3} parent=0
    _
  %s6 = ssub.s32 1, %s4
  %s7 = scalar_select 0, %s6, %s4
  $region1: #{rnn_lm_forward.3} parent=0
    #allocation3 [shape = 'u8[8192]{0}', space=vmem, size = 0x2000, scoped, tag = 'input window, operand 0, single buffered']
    #allocation4 [shape = 's32[2]{0}', space=sflag, size = 0x8, scoped, tag = 'scoped memory for rnn_lm_forward.3']
    #allocation5 [shape = 's32[2]{0}', space=sflag, size = 0x8, scoped, tag = 'scoped memory for rnn_lm_forward.3']
    #allocation6 [shape = 'u8[131072]{0}', space=vmem, size = 0x20000, scoped, tag = 'input window, operand 1']
    #allocation7 [shape = 's32[2]{0}', space=sflag, size = 0x8, scoped, tag = 'scoped memory for rnn_lm_forward.3']
    #allocation8 [shape = 'u8[2048]{0}', space=vmem, size = 0x800, scoped, tag = 'input window, operand 2']
    #allocation9 [shape = 'u8[32768]{0}', space=vmem, size = 0x8000, scoped, tag = 'output window, operand 0']
    %8 = vsyncpa [#allocation4], 0
    %9 = vsyncpa [#allocation7], 0
    %s10 = scalar_lea.sflag [#allocation7], 1
    %11 = vsyncpa %s10, 0
    %12 = vsyncpa [#allocation5], 0
    %s13 = scalar_lea.sflag [#allocation5], 1
    %14 = vsyncpa %s13, 0
    loop: start=0, step=1, limit=4
    $region2: #{rnn_lm_forward.3} parent=1 // loop_pre_header
      _
    $region3: #{rnn_lm_forward.3} parent=1 // loop_header
      %s16 = sphi 0, %s20
      %p17 = scmp.ge.s32.totalorder %s16, 4
      %s23 = sphi 0, %s42
      %s24 = sphi 0, %s38
      %s25 = sphi 0, %s34
      %s26 = sphi 0, %s23
      %s27 = sphi 0, %s24
      %s28 = sphi 0, %s25
      %s29 = sphi 0, %s26
      %s30 = sphi 0, %s27
      %s31 = sphi 0, %s28
      %s47 = sphi 0, %s49
      %s50 = sphi 0, %s47
      %s51 = sphi 0, %s50
      %s67 = sphi 0, %s51
      %s75 = sphi 0, %s77
      %s78 = sphi 0, %s75
      %s79 = sphi 0, %s78
      %s95 = sphi 0, %s79
      %s101 = sphi 0, %s103
      %s104 = sphi 0, %s101
      %s105 = sphi 0, %s104
      %s121 = sphi 0, %s105
      %s129 = sphi 0, %s131
      %s132 = sphi 0, %s129
      %s133 = sphi 0, %s132
      %s149 = sphi 0, %s133
    $region4: #{rnn_lm_forward.3} parent=1 // loop_header_branch
      %19 = sbr.rel (%p17) target = $region8
    $region5: #{rnn_lm_forward.3} parent=1 // loop_body
      %s21 = ssub.s32 %s16, 1
      %s22 = ssub.s32 %s16, 2
      %s32 = sadd.s32 1, %s25
      %p33 = scmp.ge.s32.totalorder %s32, 1
      %s34 = scalar_select %p33, 0, %s32
      %s35 = sadd.s32 1, %s24
      %s36 = scalar_select %p33, %s35, %s24
      %p37 = scmp.ge.s32.totalorder %s36, 2
      %s38 = scalar_select %p37, 0, %s36
      %s39 = sadd.s32 1, %s23
      %s40 = scalar_select %p37, %s39, %s23
      %p41 = scmp.ge.s32.totalorder %s40, 1
      %s42 = scalar_select %p41, 0, %s40
      %s43 = ssub.s32 %s23, %s42
      %s44 = ssub.s32 %s25, %s34
      %s45 = sor.u32 %s43, %s44
      %p46 = scmp.eq.s32.totalorder %s45, 0
      %s48 = sadd.s32 %s47, 1
      %s49 = scalar_select %p46, %s47, %s48
      %p52 = pneg %p46
      %p53 = scmp.eq.s32.totalorder %s16, 1
      %p54 = por %p52, %p53
      %p55 = scmp.ne.s32.totalorder %s47, %s50
      %p56 = scmp.eq.s32.totalorder %s16, 0
      %p57 = por %p55, %p56
      %p58 = scmp.ne.s32.totalorder %s47, %s50
      %p59 = scmp.eq.s32.totalorder %s21, 1
      %p60 = por %p58, %p59
      %p61 = scmp.ne.s32.totalorder %s50, %s51
      %p62 = scmp.eq.s32.totalorder %s21, 0
      %p63 = por %p61, %p62
      %p64 = scmp.ne.s32.totalorder %s50, %s51
      %p65 = scmp.eq.s32.totalorder %s22, 1
      %p66 = por %p64, %p65
      %p68 = scmp.ne.s32.totalorder %s51, %s67
      %p69 = scmp.eq.s32.totalorder %s22, 0
      %p70 = por %p68, %p69
      %s71 = ssub.s32 %s25, %s34
      %s72 = ssub.s32 %s24, %s38
      %s73 = sor.u32 %s71, %s72
      %p74 = scmp.eq.s32.totalorder %s73, 0
      %s76 = sadd.s32 %s75, 1
      %s77 = scalar_select %p74, %s75, %s76
      %p80 = pneg %p74
      %p81 = scmp.eq.s32.totalorder %s16, 1
      %p82 = por %p80, %p81
      %p83 = scmp.ne.s32.totalorder %s75, %s78
      %p84 = scmp.eq.s32.totalorder %s16, 0
      %p85 = por %p83, %p84
      %p86 = scmp.ne.s32.totalorder %s75, %s78
      %p87 = scmp.eq.s32.totalorder %s21, 1
      %p88 = por %p86, %p87
      %p89 = scmp.ne.s32.totalorder %s78, %s79
      %p90 = scmp.eq.s32.totalorder %s21, 0
      %p91 = por %p89, %p90
      %p92 = scmp.ne.s32.totalorder %s78, %s79
      %p93 = scmp.eq.s32.totalorder %s22, 1
      %p94 = por %p92, %p93
      %p96 = scmp.ne.s32.totalorder %s79, %s95
      %p97 = scmp.eq.s32.totalorder %s22, 0
      %p98 = por %p96, %p97
      %s99 = ssub.s32 %s24, %s38
      %p100 = scmp.eq.s32.totalorder %s99, 0
      %s102 = sadd.s32 %s101, 1
      %s103 = scalar_select %p100, %s101, %s102
      %p106 = pneg %p100
      %p107 = scmp.eq.s32.totalorder %s16, 1
      %p108 = por %p106, %p107
      %p109 = scmp.ne.s32.totalorder %s101, %s104
      %p110 = scmp.eq.s32.totalorder %s16, 0
      %p111 = por %p109, %p110
      %p112 = scmp.ne.s32.totalorder %s101, %s104
      %p113 = scmp.eq.s32.totalorder %s21, 1
      %p114 = por %p112, %p113
      %p115 = scmp.ne.s32.totalorder %s104, %s105
      %p116 = scmp.eq.s32.totalorder %s21, 0
      %p117 = por %p115, %p116
      %p118 = scmp.ne.s32.totalorder %s104, %s105
      %p119 = scmp.eq.s32.totalorder %s22, 1
      %p120 = por %p118, %p119
      %p122 = scmp.ne.s32.totalorder %s105, %s121
      %p123 = scmp.eq.s32.totalorder %s22, 0
      %p124 = por %p122, %p123
      %s125 = ssub.s32 %s23, %s42
      %s126 = ssub.s32 %s24, %s38
      %s127 = sor.u32 %s125, %s126
      %p128 = scmp.eq.s32.totalorder %s127, 0
      %s130 = sadd.s32 %s129, 1
      %s131 = scalar_select %p128, %s129, %s130
      %p134 = pneg %p128
      %p135 = scmp.eq.s32.totalorder %s16, 1
      %p136 = por %p134, %p135
      %p137 = scmp.ne.s32.totalorder %s129, %s132
      %p138 = scmp.eq.s32.totalorder %s16, 0
      %p139 = por %p137, %p138
      %p140 = scmp.ne.s32.totalorder %s129, %s132
      %p141 = scmp.eq.s32.totalorder %s21, 1
      %p142 = por %p140, %p141
      %p143 = scmp.ne.s32.totalorder %s132, %s133
      %p144 = scmp.eq.s32.totalorder %s21, 0
      %p145 = por %p143, %p144
      %p146 = scmp.ne.s32.totalorder %s132, %s133
      %p147 = scmp.eq.s32.totalorder %s22, 1
      %p148 = por %p146, %p147
      %p150 = scmp.ne.s32.totalorder %s133, %s149
      %p151 = scmp.eq.s32.totalorder %s22, 0
      %p152 = por %p150, %p151
      %p153 = scmp.le.s32.totalorder 1, %s16
      %p154 = scmp.lt.s32.totalorder %s16, 3
      %p155 = pnand %p153, %p154
      %p156 = pneg %p155
      // Predicated region
      $region9: #{rnn_lm_forward.3} parent=5 // pred_check
        _
      $region10: #{rnn_lm_forward.3} parent=5 // pred_check_branch
        %158 = sbr.rel (%p155) target = $region12
      $region11: #{rnn_lm_forward.3} parent=5 // pred_region
        %s159 = ssub.s32 %s16, 1
        // Predicated region
        $region13: #{rnn_lm_forward.3} parent=11 // pred_check
          %p160 = pneg %p63
        $region14: #{rnn_lm_forward.3} parent=11 // pred_check_branch
          %162 = sbr.rel (%p160) target = $region16
        $region15: #{rnn_lm_forward.3} parent=11 // pred_region
          %s163 = smul.u32 4, %s26
          %s165 = ssub.s32 256, 256
          %166 = vsyncadd [#allocation4], %s165
          %s167 = sadd.s32 %s28, %s163
          %s168 = smul.addr %s167, 64
          %s169 = scalar_lea.hbm %s0, %s168
          %s170 = sshll.u32 [#allocation3], 4
          %s171 = int_to_ptr.vmem [resolvable:$true] %s170
          %176 = dma.hbm_to_vmem [thread:$0]  %s169, 256, %s171, [#allocation4], 64, 64, 4
        $region16: #{rnn_lm_forward.3} parent=11 // pred_fallthru
          _
      $region12: #{rnn_lm_forward.3} parent=5 // pred_fallthru
        _
      %p177 = scmp.lt.s32.totalorder %s16, 2
      // Predicated region
      $region17: #{rnn_lm_forward.3} parent=5 // pred_check
        %p178 = pneg %p177
      $region18: #{rnn_lm_forward.3} parent=5 // pred_check_branch
        %180 = sbr.rel (%p178) target = $region20
      $region19: #{rnn_lm_forward.3} parent=5 // pred_region
        // Predicated region
        $region21: #{rnn_lm_forward.3} parent=19 // pred_check
          %p181 = pneg %p85
        $region22: #{rnn_lm_forward.3} parent=19 // pred_check_branch
          %183 = sbr.rel (%p181) target = $region24
        $region23: #{rnn_lm_forward.3} parent=19 // pred_region
          %s184 = sand.u32 %s16, 1
          %s185 = scalar_lea.sflag [#allocation7], %s184
          %s186 = sand.u32 %s75, 1
          %s187 = smul.addr %s186, 128
          %s188 = scalar_lea.vmem [#allocation6], %s187
          %s189 = smul.u32 16, %s25
          %s190 = smul.u32 2, %s24
          %s192 = ssub.s32 2048, 2048
          %193 = vsyncadd %s185, %s192
          %s194 = smul.addr %s189, 4
          %s195 = sadd.s32 %s190, %s194
          %s196 = smul.addr %s195, 64
          %s197 = scalar_lea.hbm %s1, %s196
          %s198 = sshll.u32 %s188, 4
          %s199 = int_to_ptr.vmem [resolvable:$true] %s198
          %204 = dma.hbm_to_vmem [thread:$0]  %s197, 2048, %s199, %s185, 256, 128, 8
        $region24: #{rnn_lm_forward.3} parent=19 // pred_fallthru
          _
        // Predicated region
        $region25: #{rnn_lm_forward.3} parent=19 // pred_check
          %p205 = pneg %p111
        $region26: #{rnn_lm_forward.3} parent=19 // pred_check_branch
          %207 = sbr.rel (%p205) target = $region28
        $region27: #{rnn_lm_forward.3} parent=19 // pred_region
          %s208 = sand.u32 %s16, 1
          %s209 = scalar_lea.sflag [#allocation7], %s208
          %s210 = sand.u32 %s101, 1
          %s211 = smul.addr %s210, 2
          %s212 = scalar_lea.vmem [#allocation8], %s211
          %s213 = smul.u32 2, %s24
          %s215 = ssub.s32 32, 32
          %216 = vsyncadd %s209, %s215
          %s217 = smul.addr %s213, 16
          %s218 = scalar_lea.hbm %s2, %s217
          %s220 = sshll.u32 %s212, 4
          %s221 = int_to_ptr.vmem [resolvable:$true] %s220
          %223 = dma.hbm_to_vmem [thread:$0]  %s218, 32, %s221, %s209
        $region28: #{rnn_lm_forward.3} parent=19 // pred_fallthru
          _
      $region20: #{rnn_lm_forward.3} parent=5 // pred_fallthru
        _
      %p224 = scmp.le.s32.totalorder 1, %s16
      %p225 = scmp.lt.s32.totalorder %s16, 3
      %p226 = pnand %p224, %p225
      %p227 = pneg %p226
      // Predicated region
      $region29: #{rnn_lm_forward.3} parent=5 // pred_check
        _
      $region30: #{rnn_lm_forward.3} parent=5 // pred_check_branch
        %229 = sbr.rel (%p226) target = $region32
      $region31: #{rnn_lm_forward.3} parent=5 // pred_region
        %s230 = ssub.s32 %s16, 1
        // Predicated region
        $region33: #{rnn_lm_forward.3} parent=31 // pred_check
          %p231 = pneg %p63
        $region34: #{rnn_lm_forward.3} parent=31 // pred_check_branch
          %233 = sbr.rel (%p231) target = $region36
        $region35: #{rnn_lm_forward.3} parent=31 // pred_region
          %234 = dma.done [#allocation4], 256
        $region36: #{rnn_lm_forward.3} parent=31 // pred_fallthru
          _
        %s235 = sand.u32 %s21, 1
        %s236 = scalar_lea.sflag [#allocation7], %s235
        %s237 = sand.u32 %s78, 1
        %s238 = smul.addr %s237, 128
        %s239 = scalar_lea.vmem [#allocation6], %s238
        // Predicated region
        $region37: #{rnn_lm_forward.3} parent=31 // pred_check
          %p240 = pneg %p91
        $region38: #{rnn_lm_forward.3} parent=31 // pred_check_branch
          %242 = sbr.rel (%p240) target = $region40
        $region39: #{rnn_lm_forward.3} parent=31 // pred_region
          %243 = dma.done %s236, 2048
        $region40: #{rnn_lm_forward.3} parent=31 // pred_fallthru
          _
        %s244 = sand.u32 %s21, 1
        %s245 = scalar_lea.sflag [#allocation7], %s244
        %s246 = sand.u32 %s104, 1
        %s247 = smul.addr %s246, 2
        %s248 = scalar_lea.vmem [#allocation8], %s247
        // Predicated region
        $region41: #{rnn_lm_forward.3} parent=31 // pred_check
          %p249 = pneg %p117
        $region42: #{rnn_lm_forward.3} parent=31 // pred_check_branch
          %251 = sbr.rel (%p249) target = $region44
        $region43: #{rnn_lm_forward.3} parent=31 // pred_region
          %252 = dma.done %s245, 32
        $region44: #{rnn_lm_forward.3} parent=31 // pred_fallthru
          _
        %p253 = pneg %p63
        %p254 = pneg %p60
        %s255 = sand.u32 %s21, 1
        %s256 = scalar_lea.sflag [#allocation7], %s255
        %s257 = sand.u32 %s78, 1
        %s258 = smul.addr %s257, 128
        %s259 = scalar_lea.vmem [#allocation6], %s258
        %p260 = pneg %p91
        %p261 = pneg %p88
        %s262 = sand.u32 %s21, 1
        %s263 = scalar_lea.sflag [#allocation7], %s262
        %s264 = sand.u32 %s104, 1
        %s265 = smul.addr %s264, 2
        %s266 = scalar_lea.vmem [#allocation8], %s265
        %p267 = pneg %p117
        %p268 = pneg %p114
        %p269 = pneg %p145
        %p270 = pneg %p142
        %s271 = sand.u32 %s132, 1
        %s272 = scalar_lea.sflag [#allocation5], %s271
        %s273 = sand.u32 %s132, 1
        %s274 = smul.addr %s273, 32
        %s275 = scalar_lea.vmem [#allocation9], %s274
        %s276 = smul.u32 4, %s26
        %s277 = smul.u32 16, %s28
        %s278 = smul.u32 2, %s27
        %s279 = smul.u32 2, %s27
        %s280 = smul.u32 4, %s26
        %s281 = smul.u32 2, %s27
        %p283 = scmp.eq.s32.totalorder %s28, 0
        // Predicated region
        $region45: #{rnn_lm_forward.3} parent=31 // pred_check
          %p284 = pneg %p283
        $region46: #{rnn_lm_forward.3} parent=31 // pred_check_branch
          %286 = sbr.rel (%p284) target = $region48
        $region47: #{rnn_lm_forward.3} parent=31 // pred_region
          %287 = vst [vmem:[#allocation2] sm:$0xff] 0.0
          %288 = vst [vmem:[#allocation2 + $0x8] sm:$0xff] 0.0
          %289 = vst [vmem:[#allocation2 + $0x10] sm:$0xff] 0.0
          %290 = vst [vmem:[#allocation2 + $0x18] sm:$0xff] 0.0
          %291 = vst [vmem:[#allocation2 + $0x20] sm:$0xff] 0.0
          %292 = vst [vmem:[#allocation2 + $0x28] sm:$0xff] 0.0
          %293 = vst [vmem:[#allocation2 + $0x30] sm:$0xff] 0.0
          %294 = vst [vmem:[#allocation2 + $0x38] sm:$0xff] 0.0
        $region48: #{rnn_lm_forward.3} parent=31 // pred_fallthru
          _
        %v295 = vld [vmem:[#allocation2] sm:$0xff]
        %v296 = vld [vmem:[#allocation2 + $0x8] sm:$0xff]
        %v297 = vld [vmem:[#allocation2 + $0x10] sm:$0xff]
        %v298 = vld [vmem:[#allocation2 + $0x18] sm:$0xff]
        %v299 = vld [vmem:[#allocation2 + $0x20] sm:$0xff]
        %v300 = vld [vmem:[#allocation2 + $0x28] sm:$0xff]
        %v301 = vld [vmem:[#allocation2 + $0x30] sm:$0xff]
        %v302 = vld [vmem:[#allocation2 + $0x38] sm:$0xff]
        %v303 = vld [vmem:[#allocation3] sm:$0xf]
        %v304 = vld [vmem:[#allocation3 + $0x4] sm:$0xf]
        %v305 = vld [vmem:[#allocation3 + $0x8] sm:$0xf]
        %v306 = vld [vmem:[#allocation3 + $0xc] sm:$0xf]
        %v307 = vld [vmem:[%s239] sm:$0xff]
        %v308 = vld [vmem:[%s239 + $0x8] sm:$0xff]
        %v309 = vld [vmem:[%s239 + $0x10] sm:$0xff]
        %v310 = vld [vmem:[%s239 + $0x18] sm:$0xff]
        %v311 = vld [vmem:[%s239 + $0x20] sm:$0xff]
        %v312 = vld [vmem:[%s239 + $0x28] sm:$0xff]
        %v313 = vld [vmem:[%s239 + $0x30] sm:$0xff]
        %v314 = vld [vmem:[%s239 + $0x38] sm:$0xff]
        %v315 = vld [vmem:[%s239 + $0x40] sm:$0xff]
        %v316 = vld [vmem:[%s239 + $0x48] sm:$0xff]
        %v317 = vld [vmem:[%s239 + $0x50] sm:$0xff]
        %v318 = vld [vmem:[%s239 + $0x58] sm:$0xff]
        %v319 = vld [vmem:[%s239 + $0x60] sm:$0xff]
        %v320 = vld [vmem:[%s239 + $0x68] sm:$0xff]
        %v321 = vld [vmem:[%s239 + $0x70] sm:$0xff]
        %v322 = vld [vmem:[%s239 + $0x78] sm:$0xff]
        %v327 = vunpack.c.l.b16 %v303
        %v328 = vunpack.c.l.b16 %v304
        %v329 = vunpack.c.l.b16 %v305
        %v330 = vunpack.c.l.b16 %v306
        %v331 = vpack.c.b16 %v328, %v327
        %v332 = vpack.c.b16 %v330, %v329
        %v351 = vunpack.c.l.b16 %v307
        %v352 = vunpack.c.h.b16 %v307
        %v353 = vunpack.c.l.b16 %v308
        %v354 = vunpack.c.h.b16 %v308
        %v355 = vunpack.c.l.b16 %v309
        %v356 = vunpack.c.h.b16 %v309
        %v357 = vunpack.c.l.b16 %v310
        %v358 = vunpack.c.h.b16 %v310
        %v359 = vunpack.c.l.b16 %v311
        %v360 = vunpack.c.h.b16 %v311
        %v361 = vunpack.c.l.b16 %v312
        %v362 = vunpack.c.h.b16 %v312
        %v363 = vunpack.c.l.b16 %v313
        %v364 = vunpack.c.h.b16 %v313
        %v365 = vunpack.c.l.b16 %v314
        %v366 = vunpack.c.h.b16 %v314
        %v367 = vunpack.c.l.b16 %v315
        %v368 = vunpack.c.h.b16 %v315
        %v369 = vunpack.c.l.b16 %v316
        %v370 = vunpack.c.h.b16 %v316
        %v371 = vunpack.c.l.b16 %v317
        %v372 = vunpack.c.h.b16 %v317
        %v373 = vunpack.c.l.b16 %v318
        %v374 = vunpack.c.h.b16 %v318
        %v375 = vunpack.c.l.b16 %v319
        %v376 = vunpack.c.h.b16 %v319
        %v377 = vunpack.c.l.b16 %v320
        %v378 = vunpack.c.h.b16 %v320
        %v379 = vunpack.c.l.b16 %v321
        %v380 = vunpack.c.h.b16 %v321
        %v381 = vunpack.c.l.b16 %v322
        %v382 = vunpack.c.h.b16 %v322
        %v383 = vpack.c.b16 %v353, %v351
        %v384 = vpack.c.b16 %v354, %v352
        %v385 = vpack.c.b16 %v357, %v355
        %v386 = vpack.c.b16 %v358, %v356
        %v387 = vpack.c.b16 %v361, %v359
        %v388 = vpack.c.b16 %v362, %v360
        %v389 = vpack.c.b16 %v365, %v363
        %v390 = vpack.c.b16 %v366, %v364
        %v391 = vpack.c.b16 %v369, %v367
        %v392 = vpack.c.b16 %v370, %v368
        %v393 = vpack.c.b16 %v373, %v371
        %v394 = vpack.c.b16 %v374, %v372
        %v395 = vpack.c.b16 %v377, %v375
        %v396 = vpack.c.b16 %v378, %v376
        %v397 = vpack.c.b16 %v381, %v379
        %v398 = vpack.c.b16 %v382, %v380
        %415 = vmatprep.subr.bf16.mxu0 %v384
        %416 = vmatpush1.bf16.msra.mxu0 %v383
        %417 = vmatprep.subr.bf16.mxu0 %v386
        %418 = vmatpush1.bf16.msra.mxu0 %v385
        %419 = vmatprep.subr.bf16.mxu0 %v388
        %420 = vmatpush1.bf16.msra.mxu0 %v387
        %421 = vmatprep.subr.bf16.mxu0 %v390
        %422 = vmatpush1.bf16.msra.mxu0 %v389
        %423 = vmatprep.subr.bf16.mxu0 %v392
        %424 = vmatpush1.bf16.msra.mxu0 %v391
        %425 = vmatprep.subr.bf16.mxu0 %v394
        %426 = vmatpush1.bf16.msra.mxu0 %v393
        %427 = vmatprep.subr.bf16.mxu0 %v396
        %428 = vmatpush1.bf16.msra.mxu0 %v395
        %429 = vmatprep.subr.bf16.mxu0 %v398
        %430 = vmatpush1.bf16.msra.mxu0 %v397
        %431 = vmatprep.subr.bf16.mxu0 0
        %432 = vmatpush1.bf16.msra.mxu0 0
        %433 = vmatprep.subr.bf16.mxu0 0
        %434 = vmatpush1.bf16.msra.mxu0 0
        %435 = vmatprep.subr.bf16.mxu0 0
        %436 = vmatpush1.bf16.msra.mxu0 0
        %437 = vmatprep.subr.bf16.mxu0 0
        %438 = vmatpush1.bf16.msra.mxu0 0
        %439 = vmatprep.subr.bf16.mxu0 0
        %440 = vmatpush1.bf16.msra.mxu0 0
        %441 = vmatprep.subr.bf16.mxu0 0
        %442 = vmatpush1.bf16.msra.mxu0 0
        %443 = vmatprep.subr.bf16.mxu0 0
        %444 = vmatpush1.bf16.msra.mxu0 0
        %445 = vmatprep.subr.bf16.mxu0 0
        %446 = vmatpush1.bf16.msra.mxu0 0
        %447 = vmatprep.mubr.bf16.mxu0 0
        %448 = vmatmul.mubr.bf16.gmra.mrb[0].mxu0 %v331
        %v449 = vpop.f32.mrb[0].mxu0
        %v450 = vadd.f32 0.0, %v449
        %v451 = vpop.f32.mrb[0].mxu0
        %v452 = vadd.f32 0.0, %v451
        %v453 = vpop.f32.mrb[0].mxu0
        %v454 = vadd.f32 0.0, %v453
        %v455 = vpop.f32.mrb[0].mxu0
        %v456 = vadd.f32 0.0, %v455
        %457 = vmatprep.mubr.bf16.mxu0 0
        %458 = vmatmul.mubr.bf16.gmra.mrb[0].mxu0 %v332
        %v459 = vpop.f32.mrb[0].mxu0
        %v460 = vadd.f32 0.0, %v459
        %v461 = vpop.f32.mrb[0].mxu0
        %v462 = vadd.f32 0.0, %v461
        %v463 = vpop.f32.mrb[0].mxu0
        %v464 = vadd.f32 0.0, %v463
        %v465 = vpop.f32.mrb[0].mxu0
        %v466 = vadd.f32 0.0, %v465
        %467 = vdwg.mxu0
        %v468 = vadd.f32 %v295, %v450
        %v469 = vadd.f32 %v296, %v452
        %v470 = vadd.f32 %v297, %v454
        %v471 = vadd.f32 %v298, %v456
        %v472 = vadd.f32 %v299, %v460
        %v473 = vadd.f32 %v300, %v462
        %v474 = vadd.f32 %v301, %v464
        %v475 = vadd.f32 %v302, %v466
        %476 = vst [vmem:[#allocation2] sm:$0xff] %v468
        %477 = vst [vmem:[#allocation2 + $0x8] sm:$0xff] %v469
        %478 = vst [vmem:[#allocation2 + $0x10] sm:$0xff] %v470
        %479 = vst [vmem:[#allocation2 + $0x18] sm:$0xff] %v471
        %480 = vst [vmem:[#allocation2 + $0x20] sm:$0xff] %v472
        %481 = vst [vmem:[#allocation2 + $0x28] sm:$0xff] %v473
        %482 = vst [vmem:[#allocation2 + $0x30] sm:$0xff] %v474
        %483 = vst [vmem:[#allocation2 + $0x38] sm:$0xff] %v475
        // Predicated region
        $region49: #{rnn_lm_forward.3} parent=31 // pred_check
          %p484 = pneg %p283
        $region50: #{rnn_lm_forward.3} parent=31 // pred_check_branch
          %486 = sbr.rel (%p484) target = $region52
        $region51: #{rnn_lm_forward.3} parent=31 // pred_region
          %v487 = vld [vmem:[#allocation2] sm:$0xff]
          %v488 = vld [vmem:[#allocation2 + $0x8] sm:$0xff]
          %v489 = vld [vmem:[#allocation2 + $0x10] sm:$0xff]
          %v490 = vld [vmem:[#allocation2 + $0x18] sm:$0xff]
          %v491 = vld [vmem:[#allocation2 + $0x20] sm:$0xff]
          %v492 = vld [vmem:[#allocation2 + $0x28] sm:$0xff]
          %v493 = vld [vmem:[#allocation2 + $0x30] sm:$0xff]
          %v494 = vld [vmem:[#allocation2 + $0x38] sm:$0xff]
          %v495 = vld [vmem:[%s248] sm:$0x3]
          %v497 = vlaneseq
          %v498 = vshrl.u32 %v497, 7
          %v499 = vsub.s32 0, %v498
          %v500 = vrot.slane %v495, %v499
          %v501 = vlaneseq
          %v502 = vshrl.u32 %v501, 7
          %v503 = vsub.s32 1, %v502
          %v504 = vrot.slane %v495, %v503
          %v507 = vadd.f32 %v487, %v500
          %v508 = vadd.f32 %v488, %v504
          %v509 = vadd.f32 %v489, %v500
          %v510 = vadd.f32 %v490, %v504
          %v511 = vadd.f32 %v491, %v500
          %v512 = vadd.f32 %v492, %v504
          %v513 = vadd.f32 %v493, %v500
          %v514 = vadd.f32 %v494, %v504
          %v515 = vpack.c.bf16 %v509, %v507
          %v516 = vpack.c.bf16 %v510, %v508
          %v517 = vpack.c.bf16 %v513, %v511
          %v518 = vpack.c.bf16 %v514, %v512
          %v523 = vunpack.c.l.b16 %v515
          %v524 = vunpack.c.l.b16 %v516
          %v525 = vunpack.c.h.b16 %v515
          %v526 = vunpack.c.h.b16 %v516
          %v527 = vunpack.c.l.b16 %v517
          %v528 = vunpack.c.l.b16 %v518
          %v529 = vunpack.c.h.b16 %v517
          %v530 = vunpack.c.h.b16 %v518
          %v531 = vpack.c.b16 %v524, %v523
          %v532 = vpack.c.b16 %v526, %v525
          %v533 = vpack.c.b16 %v528, %v527
          %v534 = vpack.c.b16 %v530, %v529
          %539 = vst [vmem:[%s275] sm:$0xff] %v531
          %540 = vst [vmem:[%s275 + $0x8] sm:$0xff] %v532
          %541 = vst [vmem:[%s275 + $0x10] sm:$0xff] %v533
          %542 = vst [vmem:[%s275 + $0x18] sm:$0xff] %v534
        $region52: #{rnn_lm_forward.3} parent=31 // pred_fallthru
          _
        %s543 = sand.u32 %s132, 1
        %s544 = scalar_lea.sflag [#allocation5], %s543
        %s545 = sand.u32 %s132, 1
        %s546 = smul.addr %s545, 32
        %s547 = scalar_lea.vmem [#allocation9], %s546
        // Predicated region
        $region53: #{rnn_lm_forward.3} parent=31 // pred_check
          %p548 = pneg %p142
        $region54: #{rnn_lm_forward.3} parent=31 // pred_check_branch
          %550 = sbr.rel (%p548) target = $region56
        $region55: #{rnn_lm_forward.3} parent=31 // pred_region
          %s551 = smul.u32 4, %s26
          %s552 = smul.u32 2, %s27
          %s554 = ssub.s32 512, 512
          %555 = vsyncadd %s544, %s554
          %s556 = smul.addr %s551, 4
          %s557 = sadd.s32 %s552, %s556
          %s558 = smul.addr %s557, 64
          %s559 = scalar_lea.hbm %s3, %s558
          %s560 = sshll.u32 %s547, 4
          %s561 = int_to_ptr.vmem [resolvable:$true] %s560
          %566 = dma.vmem_to_hbm [thread:$0]  %s561, 512, %s559, %s544, 128, 256, 8
        $region56: #{rnn_lm_forward.3} parent=31 // pred_fallthru
          _
      $region32: #{rnn_lm_forward.3} parent=5 // pred_fallthru
        _
      %p567 = scmp.le.s32.totalorder 2, %s16
      // Predicated region
      $region57: #{rnn_lm_forward.3} parent=5 // pred_check
        %p568 = pneg %p567
      $region58: #{rnn_lm_forward.3} parent=5 // pred_check_branch
        %570 = sbr.rel (%p568) target = $region60
      $region59: #{rnn_lm_forward.3} parent=5 // pred_region
        %s571 = ssub.s32 %s16, 2
        // Predicated region
        $region61: #{rnn_lm_forward.3} parent=59 // pred_check
          %p572 = pneg %p148
        $region62: #{rnn_lm_forward.3} parent=59 // pred_check_branch
          %574 = sbr.rel (%p572) target = $region64
        $region63: #{rnn_lm_forward.3} parent=59 // pred_region
          %s575 = sand.u32 %s133, 1
          %s576 = scalar_lea.sflag [#allocation5], %s575
          %s577 = sand.u32 %s133, 1
          %s578 = smul.addr %s577, 32
          %s579 = scalar_lea.vmem [#allocation9], %s578
          %580 = dma.done %s576, 512
        $region64: #{rnn_lm_forward.3} parent=59 // pred_fallthru
          _
      $region60: #{rnn_lm_forward.3} parent=5 // pred_fallthru
        _
    $region6: #{rnn_lm_forward.3} parent=1 // loop_footer
      %s20 = sadd.s32 1, %s16
    $region7: #{rnn_lm_forward.3} parent=1 // loop_footer_branch
      %15 = sbr.rel target = $region3
    $region8: #{rnn_lm_forward.3} parent=1 // loop_exit
      _
    %581 = vsyncpa [#allocation4], 1
    %s582 = scalar_lea.sflag [#allocation4], 1
    %583 = vsyncpa %s582, 1
    %584 = vsyncpa [#allocation7], 1
    %s585 = scalar_lea.sflag [#allocation7], 1
    %586 = vsyncpa %s585, 1
    %587 = vsyncpa [#allocation5], 1
    %s588 = scalar_lea.sflag [#allocation5], 1
    %589 = vsyncpa %s588, 1

// kernel: rnn_lm_forward.4
$region0: #{rnn_lm_forward.4}
  #allocation0 [shape = 'u32[]', space=smem, size = 0x4, offset = 0x4, fixed_abs, tag = 'smem constant byte address 0x4 - core index']
  #allocation1 [shape = 'u32[144,128]{1,0:T(1,128)}', space=vmem, size = 0x12000, scoped, tag = 'internal scratch']
  #allocation2 [shape = 'f32[8,128]{1,0:T(8,128)}', space=vmem, size = 0x1000, scoped, tag = 'scratch operand']
  #allocation3 [shape = 'f32[8,128]{1,0:T(8,128)}', space=vmem, size = 0x1000, scoped, tag = 'scratch operand']
  %s0 = inlined_call_operand.hbm [shape: bf16[8,8,512], index: 0, kind: input, shape index: {}]
  %s1 = inlined_call_operand.hbm [shape: bf16[128,512], index: 1, kind: input, shape index: {}]
  %s2 = inlined_call_operand.hbm [shape: bf16[8,8,128], index: 2, kind: output, shape index: {}]
  %s3 = sld [smem:[#allocation0]]
  $region30: #{rnn_lm_forward.4} parent=0
    _
  %s5 = ssub.s32 1, %s3
  %s6 = scalar_select 0, %s5, %s3
  $region1: #{rnn_lm_forward.4} parent=0
    #allocation4 [shape = 'u8[65536]{0}', space=vmem, size = 0x10000, scoped, tag = 'input window, operand 0, single buffered']
    #allocation5 [shape = 's32[1]{0}', space=sflag, size = 0x4, scoped, tag = 'scoped memory for rnn_lm_forward.4']
    #allocation6 [shape = 's32[1]{0}', space=sflag, size = 0x4, scoped, tag = 'scoped memory for rnn_lm_forward.4']
    #allocation7 [shape = 'u8[131072]{0}', space=vmem, size = 0x20000, scoped, tag = 'input window, operand 1, single buffered']
    #allocation8 [shape = 's32[1]{0}', space=sflag, size = 0x4, scoped, tag = 'scoped memory for rnn_lm_forward.4']
    #allocation9 [shape = 'u8[16384]{0}', space=vmem, size = 0x4000, scoped, tag = 'output window, operand 0, single buffered']
    %7 = vsyncpa [#allocation5], 0
    %8 = vsyncpa [#allocation8], 0
    %9 = vsyncpa [#allocation6], 0
    // Predicated region
    $region2: #{rnn_lm_forward.4} parent=1 // pred_check
      _
    $region3: #{rnn_lm_forward.4} parent=1 // pred_check_branch
      %11 = sbr.rel (0) target = $region5
    $region4: #{rnn_lm_forward.4} parent=1 // pred_region
      %s13 = ssub.s32 2048, 2048
      %14 = vsyncadd [#allocation5], %s13
      %s15 = sshll.u32 [#allocation4], 4
      %s16 = int_to_ptr.vmem [resolvable:$true] %s15
      %21 = dma.hbm_to_vmem [thread:$0]  %s0, 2048, %s16, [#allocation5], 256, 256, 16
    $region5: #{rnn_lm_forward.4} parent=1 // pred_fallthru
      _
    // Predicated region
    $region6: #{rnn_lm_forward.4} parent=1 // pred_check
      _
    $region7: #{rnn_lm_forward.4} parent=1 // pred_check_branch
      %23 = sbr.rel (0) target = $region9
    $region8: #{rnn_lm_forward.4} parent=1 // pred_region
      %s25 = ssub.s32 4096, 4096
      %26 = vsyncadd [#allocation8], %s25
      %s27 = sshll.u32 [#allocation7], 4
      %s28 = int_to_ptr.vmem [resolvable:$true] %s27
      %33 = dma.hbm_to_vmem [thread:$0]  %s1, 4096, %s28, [#allocation8], 256, 256, 16
    $region9: #{rnn_lm_forward.4} parent=1 // pred_fallthru
      _
    // Predicated region
    $region10: #{rnn_lm_forward.4} parent=1 // pred_check
      _
    $region11: #{rnn_lm_forward.4} parent=1 // pred_check_branch
      %35 = sbr.rel (0) target = $region13
    $region12: #{rnn_lm_forward.4} parent=1 // pred_region
      %36 = dma.done [#allocation5], 2048
    $region13: #{rnn_lm_forward.4} parent=1 // pred_fallthru
      _
    // Predicated region
    $region14: #{rnn_lm_forward.4} parent=1 // pred_check
      _
    $region15: #{rnn_lm_forward.4} parent=1 // pred_check_branch
      %38 = sbr.rel (0) target = $region17
    $region16: #{rnn_lm_forward.4} parent=1 // pred_region
      %39 = dma.done [#allocation8], 4096
    $region17: #{rnn_lm_forward.4} parent=1 // pred_fallthru
      _
    %p41 = scmp.eq.s32.totalorder 0, 0
    // Predicated region
    $region18: #{rnn_lm_forward.4} parent=1 // pred_check
      %p42 = pneg %p41
    $region19: #{rnn_lm_forward.4} parent=1 // pred_check_branch
      %44 = sbr.rel (%p42) target = $region21
    $region20: #{rnn_lm_forward.4} parent=1 // pred_region
      %45 = vst [vmem:[#allocation2] sm:$0xff] 0.0
      %46 = vst [vmem:[#allocation3] sm:$0xff] 0.0
    $region21: #{rnn_lm_forward.4} parent=1 // pred_fallthru
      _
    %v47 = vld [vmem:[#allocation7] sm:$0xff]
    %v48 = vld [vmem:[#allocation7 + $0x8] sm:$0xff]
    %v49 = vld [vmem:[#allocation7 + $0x10] sm:$0xff]
    %v50 = vld [vmem:[#allocation7 + $0x18] sm:$0xff]
    %v51 = vld [vmem:[#allocation7 + $0x20] sm:$0xff]
    %v52 = vld [vmem:[#allocation7 + $0x28] sm:$0xff]
    %v53 = vld [vmem:[#allocation7 + $0x30] sm:$0xff]
    %v54 = vld [vmem:[#allocation7 + $0x38] sm:$0xff]
    %v55 = vld [vmem:[#allocation7 + $0x40] sm:$0xff]
    %v56 = vld [vmem:[#allocation7 + $0x48] sm:$0xff]
    %v57 = vld [vmem:[#allocation7 + $0x50] sm:$0xff]
    %v58 = vld [vmem:[#allocation7 + $0x58] sm:$0xff]
    %v59 = vld [vmem:[#allocation7 + $0x60] sm:$0xff]
    %v60 = vld [vmem:[#allocation7 + $0x68] sm:$0xff]
    %v61 = vld [vmem:[#allocation7 + $0x70] sm:$0xff]
    %v62 = vld [vmem:[#allocation7 + $0x78] sm:$0xff]
    %v63 = vld [vmem:[#allocation7 + $0x80] sm:$0xff]
    %v64 = vld [vmem:[#allocation7 + $0x88] sm:$0xff]
    %v65 = vld [vmem:[#allocation7 + $0x90] sm:$0xff]
    %v66 = vld [vmem:[#allocation7 + $0x98] sm:$0xff]
    %v67 = vld [vmem:[#allocation7 + $0xa0] sm:$0xff]
    %v68 = vld [vmem:[#allocation7 + $0xa8] sm:$0xff]
    %v69 = vld [vmem:[#allocation7 + $0xb0] sm:$0xff]
    %v70 = vld [vmem:[#allocation7 + $0xb8] sm:$0xff]
    %v71 = vld [vmem:[#allocation7 + $0xc0] sm:$0xff]
    %v72 = vld [vmem:[#allocation7 + $0xc8] sm:$0xff]
    %v73 = vld [vmem:[#allocation7 + $0xd0] sm:$0xff]
    %v74 = vld [vmem:[#allocation7 + $0xd8] sm:$0xff]
    %v75 = vld [vmem:[#allocation7 + $0xe0] sm:$0xff]
    %v76 = vld [vmem:[#allocation7 + $0xe8] sm:$0xff]
    %v77 = vld [vmem:[#allocation7 + $0xf0] sm:$0xff]
    %v78 = vld [vmem:[#allocation7 + $0xf8] sm:$0xff]
    %v79 = vld [vmem:[#allocation2] sm:$0xff]
    %v80 = vld [vmem:[#allocation3] sm:$0xff]
    %v81 = vld [vmem:[#allocation4] sm:$0xff]
    %v82 = vld [vmem:[#allocation4 + $0x8] sm:$0xff]
    %v83 = vunpack.c.l.bf16 %v81
    %v84 = vunpack.c.h.bf16 %v81
    %v85 = vunpack.c.l.bf16 %v82
    %v86 = vunpack.c.h.bf16 %v82
    %v87 = vpack.c.bf16 %v79, %v79
    %v120 = vunpack.c.l.b16 %v47
    %v121 = vunpack.c.h.b16 %v47
    %v122 = vunpack.c.l.b16 %v48
    %v123 = vunpack.c.h.b16 %v48
    %v124 = vunpack.c.l.b16 %v49
    %v125 = vunpack.c.h.b16 %v49
    %v126 = vunpack.c.l.b16 %v50
    %v127 = vunpack.c.h.b16 %v50
    %v128 = vunpack.c.l.b16 %v51
    %v129 = vunpack.c.h.b16 %v51
    %v130 = vunpack.c.l.b16 %v52
    %v131 = vunpack.c.h.b16 %v52
    %v132 = vunpack.c.l.b16 %v53
    %v133 = vunpack.c.h.b16 %v53
    %v134 = vunpack.c.l.b16 %v54
    %v135 = vunpack.c.h.b16 %v54
    %v136 = vunpack.c.l.b16 %v55
    %v137 = vunpack.c.h.b16 %v55
    %v138 = vunpack.c.l.b16 %v56
    %v139 = vunpack.c.h.b16 %v56
    %v140 = vunpack.c.l.b16 %v57
    %v141 = vunpack.c.h.b16 %v57
    %v142 = vunpack.c.l.b16 %v58
    %v143 = vunpack.c.h.b16 %v58
    %v144 = vunpack.c.l.b16 %v59
    %v145 = vunpack.c.h.b16 %v59
    %v146 = vunpack.c.l.b16 %v60
    %v147 = vunpack.c.h.b16 %v60
    %v148 = vunpack.c.l.b16 %v61
    %v149 = vunpack.c.h.b16 %v61
    %v150 = vunpack.c.l.b16 %v62
    %v151 = vunpack.c.h.b16 %v62
    %v152 = vunpack.c.l.b16 %v63
    %v153 = vunpack.c.h.b16 %v63
    %v154 = vunpack.c.l.b16 %v64
    %v155 = vunpack.c.h.b16 %v64
    %v156 = vunpack.c.l.b16 %v65
    %v157 = vunpack.c.h.b16 %v65
    %v158 = vunpack.c.l.b16 %v66
    %v159 = vunpack.c.h.b16 %v66
    %v160 = vunpack.c.l.b16 %v67
    %v161 = vunpack.c.h.b16 %v67
    %v162 = vunpack.c.l.b16 %v68
    %v163 = vunpack.c.h.b16 %v68
    %v164 = vunpack.c.l.b16 %v69
    %v165 = vunpack.c.h.b16 %v69
    %v166 = vunpack.c.l.b16 %v70
    %v167 = vunpack.c.h.b16 %v70
    %v168 = vunpack.c.l.b16 %v71
    %v169 = vunpack.c.h.b16 %v71
    %v170 = vunpack.c.l.b16 %v72
    %v171 = vunpack.c.h.b16 %v72
    %v172 = vunpack.c.l.b16 %v73
    %v173 = vunpack.c.h.b16 %v73
    %v174 = vunpack.c.l.b16 %v74
    %v175 = vunpack.c.h.b16 %v74
    %v176 = vunpack.c.l.b16 %v75
    %v177 = vunpack.c.h.b16 %v75
    %v178 = vunpack.c.l.b16 %v76
    %v179 = vunpack.c.h.b16 %v76
    %v180 = vunpack.c.l.b16 %v77
    %v181 = vunpack.c.h.b16 %v77
    %v182 = vunpack.c.l.b16 %v78
    %v183 = vunpack.c.h.b16 %v78
    %v184 = vpack.c.b16 %v124, %v120
    %v185 = vpack.c.b16 %v125, %v121
    %v186 = vpack.c.b16 %v126, %v122
    %v187 = vpack.c.b16 %v127, %v123
    %v188 = vpack.c.b16 %v132, %v128
    %v189 = vpack.c.b16 %v133, %v129
    %v190 = vpack.c.b16 %v134, %v130
    %v191 = vpack.c.b16 %v135, %v131
    %v192 = vpack.c.b16 %v140, %v136
    %v193 = vpack.c.b16 %v141, %v137
    %v194 = vpack.c.b16 %v142, %v138
    %v195 = vpack.c.b16 %v143, %v139
    %v196 = vpack.c.b16 %v148, %v144
    %v197 = vpack.c.b16 %v149, %v145
    %v198 = vpack.c.b16 %v150, %v146
    %v199 = vpack.c.b16 %v151, %v147
    %v200 = vpack.c.b16 %v156, %v152
    %v201 = vpack.c.b16 %v157, %v153
    %v202 = vpack.c.b16 %v158, %v154
    %v203 = vpack.c.b16 %v159, %v155
    %v204 = vpack.c.b16 %v164, %v160
    %v205 = vpack.c.b16 %v165, %v161
    %v206 = vpack.c.b16 %v166, %v162
    %v207 = vpack.c.b16 %v167, %v163
    %v208 = vpack.c.b16 %v172, %v168
    %v209 = vpack.c.b16 %v173, %v169
    %v210 = vpack.c.b16 %v174, %v170
    %v211 = vpack.c.b16 %v175, %v171
    %v212 = vpack.c.b16 %v180, %v176
    %v213 = vpack.c.b16 %v181, %v177
    %v214 = vpack.c.b16 %v182, %v178
    %v215 = vpack.c.b16 %v183, %v179
    %248 = vmatprep.subr.bf16.mxu0 %v185
    %249 = vmatpush1.bf16.msra.mxu0 %v184
    %250 = vmatprep.subr.bf16.mxu0 %v189
    %251 = vmatpush1.bf16.msra.mxu0 %v188
    %252 = vmatprep.subr.bf16.mxu0 %v193
    %253 = vmatpush1.bf16.msra.mxu0 %v192
    %254 = vmatprep.subr.bf16.mxu0 %v197
    %255 = vmatpush1.bf16.msra.mxu0 %v196
    %256 = vmatprep.subr.bf16.mxu0 %v201
    %257 = vmatpush1.bf16.msra.mxu0 %v200
    %258 = vmatprep.subr.bf16.mxu0 %v205
    %259 = vmatpush1.bf16.msra.mxu0 %v204
    %260 = vmatprep.subr.bf16.mxu0 %v209
    %261 = vmatpush1.bf16.msra.mxu0 %v208
    %262 = vmatprep.subr.bf16.mxu0 %v213
    %263 = vmatpush1.bf16.msra.mxu0 %v212
    %264 = vmatprep.subr.bf16.mxu0 0
    %265 = vmatpush1.bf16.msra.mxu0 0
    %266 = vmatprep.subr.bf16.mxu0 0
    %267 = vmatpush1.bf16.msra.mxu0 0
    %268 = vmatprep.subr.bf16.mxu0 0
    %269 = vmatpush1.bf16.msra.mxu0 0
    %270 = vmatprep.subr.bf16.mxu0 0
    %271 = vmatpush1.bf16.msra.mxu0 0
    %272 = vmatprep.subr.bf16.mxu0 0
    %273 = vmatpush1.bf16.msra.mxu0 0
    %274 = vmatprep.subr.bf16.mxu0 0
    %275 = vmatpush1.bf16.msra.mxu0 0
    %276 = vmatprep.subr.bf16.mxu0 0
    %277 = vmatpush1.bf16.msra.mxu0 0
    %278 = vmatprep.subr.bf16.mxu0 0
    %279 = vmatpush1.bf16.msra.mxu0 0
    %280 = vmatprep.mubr.bf16.mxu0 0
    %281 = vmatmul.mubr.bf16.gmra.mrb[0].mxu0 %v87
    %v282 = vpop.f32.mrb[0].mxu0
    %v283 = vadd.f32 0.0, %v282
    %v284 = vpop.f32.mrb[0].mxu0
    %v285 = vadd.f32 0.0, %v284
    %v286 = vpop.f32.mrb[0].mxu0
    %v287 = vpop.f32.mrb[0].mxu0
    %288 = vdwg.mxu0
    %289 = vmatprep.subr.bf16.mxu0 %v187
    %290 = vmatpush1.bf16.msra.mxu0 %v186
    %291 = vmatprep.subr.bf16.mxu0 %v191
    %292 = vmatpush1.bf16.msra.mxu0 %v190
    %293 = vmatprep.subr.bf16.mxu0 %v195
    %294 = vmatpush1.bf16.msra.mxu0 %v194
    %295 = vmatprep.subr.bf16.mxu0 %v199
    %296 = vmatpush1.bf16.msra.mxu0 %v198
    %297 = vmatprep.subr.bf16.mxu0 %v203
    %298 = vmatpush1.bf16.msra.mxu0 %v202
    %299 = vmatprep.subr.bf16.mxu0 %v207
    %300 = vmatpush1.bf16.msra.mxu0 %v206
    %301 = vmatprep.subr.bf16.mxu0 %v211
    %302 = vmatpush1.bf16.msra.mxu0 %v210
    %303 = vmatprep.subr.bf16.mxu0 %v215
    %304 = vmatpush1.bf16.msra.mxu0 %v214
    %305 = vmatprep.subr.bf16.mxu0 0
    %306 = vmatpush1.bf16.msra.mxu0 0
    %307 = vmatprep.subr.bf16.mxu0 0
    %308 = vmatpush1.bf16.msra.mxu0 0
    %309 = vmatprep.subr.bf16.mxu0 0
    %310 = vmatpush1.bf16.msra.mxu0 0
    %311 = vmatprep.subr.bf16.mxu0 0
    %312 = vmatpush1.bf16.msra.mxu0 0
    %313 = vmatprep.subr.bf16.mxu0 0
    %314 = vmatpush1.bf16.msra.mxu0 0
    %315 = vmatprep.subr.bf16.mxu0 0
    %316 = vmatpush1.bf16.msra.mxu0 0
    %317 = vmatprep.subr.bf16.mxu0 0
    %318 = vmatpush1.bf16.msra.mxu0 0
    %319 = vmatprep.subr.bf16.mxu0 0
    %320 = vmatpush1.bf16.msra.mxu0 0
    %321 = vmatprep.mubr.bf16.mxu0 0
    %322 = vmatmul.mubr.bf16.gmra.mrb[0].mxu0 %v87
    %v323 = vpop.f32.mrb[0].mxu0
    %v324 = vadd.f32 0.0, %v323
    %v325 = vpop.f32.mrb[0].mxu0
    %v326 = vadd.f32 0.0, %v325
    %v327 = vpop.f32.mrb[0].mxu0
    %v328 = vpop.f32.mrb[0].mxu0
    %329 = vdwg.mxu0
    %v330 = vadd.f32 %v83, %v283
    %v331 = vadd.f32 %v84, %v285
    %v332 = vadd.f32 %v85, %v324
    %v333 = vadd.f32 %v86, %v326
    %v334 = vxor.u32 %v330, 2147483648
    %v335 = vmul.f32 %v334, 1.442695
    %v336 = vpow.pop %v335
    %v337 = vadd.f32 %v336, 1.0
    %v338 = vrcp.pop %v337
    %v339 = vmul.f32 1.0, %v338
    %v340 = vxor.u32 %v331, 2147483648
    %v341 = vmul.f32 %v340, 1.442695
    %v342 = vpow.pop %v341
    %v343 = vadd.f32 %v342, 1.0
    %v344 = vrcp.pop %v343
    %v345 = vmul.f32 1.0, %v344
    %v346 = vtanh.pop %v332
    %v347 = vxor.u32 %v333, 2147483648
    %v348 = vmul.f32 %v347, 1.442695
    %v349 = vpow.pop %v348
    %v350 = vadd.f32 %v349, 1.0
    %v351 = vrcp.pop %v350
    %v352 = vmul.f32 1.0, %v351
    %v353 = vmul.f32 %v345, %v80
    %v354 = vmul.f32 %v339, %v346
    %v355 = vadd.f32 %v353, %v354
    %v356 = vtanh.pop %v355
    %v357 = vmul.f32 %v352, %v356
    %v358 = vpack.c.bf16 %v357, %v357
    %359 = vst [vmem:[#allocation9] sm:$0xf] %v358
    %s360 = scalar_lea.vmem [#allocation4], 16
    %v361 = vld [vmem:[%s360] sm:$0xff]
    %v362 = vld [vmem:[%s360 + $0x8] sm:$0xff]
    %v363 = vunpack.c.l.bf16 %v361
    %v364 = vunpack.c.h.bf16 %v361
    %v365 = vunpack.c.l.bf16 %v362
    %v366 = vunpack.c.h.bf16 %v362
    %367 = vmatprep.subr.bf16.mxu0 %v185
    %368 = vmatpush1.bf16.msra.mxu0 %v184
    %369 = vmatprep.subr.bf16.mxu0 %v189
    %370 = vmatpush1.bf16.msra.mxu0 %v188
    %371 = vmatprep.subr.bf16.mxu0 %v193
    %372 = vmatpush1.bf16.msra.mxu0 %v192
    %373 = vmatprep.subr.bf16.mxu0 %v197
    %374 = vmatpush1.bf16.msra.mxu0 %v196
    %375 = vmatprep.subr.bf16.mxu0 %v201
    %376 = vmatpush1.bf16.msra.mxu0 %v200
    %377 = vmatprep.subr.bf16.mxu0 %v205
    %378 = vmatpush1.bf16.msra.mxu0 %v204
    %379 = vmatprep.subr.bf16.mxu0 %v209
    %380 = vmatpush1.bf16.msra.mxu0 %v208
    %381 = vmatprep.subr.bf16.mxu0 %v213
    %382 = vmatpush1.bf16.msra.mxu0 %v212
    %383 = vmatprep.subr.bf16.mxu0 0
    %384 = vmatpush1.bf16.msra.mxu0 0
    %385 = vmatprep.subr.bf16.mxu0 0
    %386 = vmatpush1.bf16.msra.mxu0 0
    %387 = vmatprep.subr.bf16.mxu0 0
    %388 = vmatpush1.bf16.msra.mxu0 0
    %389 = vmatprep.subr.bf16.mxu0 0
    %390 = vmatpush1.bf16.msra.mxu0 0
    %391 = vmatprep.subr.bf16.mxu0 0
    %392 = vmatpush1.bf16.msra.mxu0 0
    %393 = vmatprep.subr.bf16.mxu0 0
    %394 = vmatpush1.bf16.msra.mxu0 0
    %395 = vmatprep.subr.bf16.mxu0 0
    %396 = vmatpush1.bf16.msra.mxu0 0
    %397 = vmatprep.subr.bf16.mxu0 0
    %398 = vmatpush1.bf16.msra.mxu0 0
    %399 = vmatprep.mubr.bf16.mxu0 0
    %400 = vmatmul.mubr.bf16.gmra.mrb[0].mxu0 %v358
    %v401 = vpop.f32.mrb[0].mxu0
    %v402 = vadd.f32 0.0, %v401
    %v403 = vpop.f32.mrb[0].mxu0
    %v404 = vadd.f32 0.0, %v403
    %v405 = vpop.f32.mrb[0].mxu0
    %v406 = vpop.f32.mrb[0].mxu0
    %407 = vdwg.mxu0
    %408 = vmatprep.subr.bf16.mxu0 %v187
    %409 = vmatpush1.bf16.msra.mxu0 %v186
    %410 = vmatprep.subr.bf16.mxu0 %v191
    %411 = vmatpush1.bf16.msra.mxu0 %v190
    %412 = vmatprep.subr.bf16.mxu0 %v195
    %413 = vmatpush1.bf16.msra.mxu0 %v194
    %414 = vmatprep.subr.bf16.mxu0 %v199
    %415 = vmatpush1.bf16.msra.mxu0 %v198
    %416 = vmatprep.subr.bf16.mxu0 %v203
    %417 = vmatpush1.bf16.msra.mxu0 %v202
    %418 = vmatprep.subr.bf16.mxu0 %v207
    %419 = vmatpush1.bf16.msra.mxu0 %v206
    %420 = vmatprep.subr.bf16.mxu0 %v211
    %421 = vmatpush1.bf16.msra.mxu0 %v210
    %422 = vmatprep.subr.bf16.mxu0 %v215
    %423 = vmatpush1.bf16.msra.mxu0 %v214
    %424 = vmatprep.subr.bf16.mxu0 0
    %425 = vmatpush1.bf16.msra.mxu0 0
    %426 = vmatprep.subr.bf16.mxu0 0
    %427 = vmatpush1.bf16.msra.mxu0 0
    %428 = vmatprep.subr.bf16.mxu0 0
    %429 = vmatpush1.bf16.msra.mxu0 0
    %430 = vmatprep.subr.bf16.mxu0 0
    %431 = vmatpush1.bf16.msra.mxu0 0
    %432 = vmatprep.subr.bf16.mxu0 0
    %433 = vmatpush1.bf16.msra.mxu0 0
    %434 = vmatprep.subr.bf16.mxu0 0
    %435 = vmatpush1.bf16.msra.mxu0 0
    %436 = vmatprep.subr.bf16.mxu0 0
    %437 = vmatpush1.bf16.msra.mxu0 0
    %438 = vmatprep.subr.bf16.mxu0 0
    %439 = vmatpush1.bf16.msra.mxu0 0
    %440 = vmatprep.mubr.bf16.mxu0 0
    %441 = vmatmul.mubr.bf16.gmra.mrb[0].mxu0 %v358
    %v442 = vpop.f32.mrb[0].mxu0
    %v443 = vadd.f32 0.0, %v442
    %v444 = vpop.f32.mrb[0].mxu0
    %v445 = vadd.f32 0.0, %v444
    %v446 = vpop.f32.mrb[0].mxu0
    %v447 = vpop.f32.mrb[0].mxu0
    %448 = vdwg.mxu0
    %v449 = vadd.f32 %v363, %v402
    %v450 = vadd.f32 %v364, %v404
    %v451 = vadd.f32 %v365, %v443
    %v452 = vadd.f32 %v366, %v445
    %v453 = vxor.u32 %v449, 2147483648
    %v454 = vmul.f32 %v453, 1.442695
    %v455 = vpow.pop %v454
    %v456 = vadd.f32 %v455, 1.0
    %v457 = vrcp.pop %v456
    %v458 = vmul.f32 1.0, %v457
    %v459 = vxor.u32 %v450, 2147483648
    %v460 = vmul.f32 %v459, 1.442695
    %v461 = vpow.pop %v460
    %v462 = vadd.f32 %v461, 1.0
    %v463 = vrcp.pop %v462
    %v464 = vmul.f32 1.0, %v463
    %v465 = vtanh.pop %v451
    %v466 = vxor.u32 %v452, 2147483648
    %v467 = vmul.f32 %v466, 1.442695
    %v468 = vpow.pop %v467
    %v469 = vadd.f32 %v468, 1.0
    %v470 = vrcp.pop %v469
    %v471 = vmul.f32 1.0, %v470
    %v472 = vmul.f32 %v464, %v355
    %v473 = vmul.f32 %v458, %v465
    %v474 = vadd.f32 %v472, %v473
    %v475 = vtanh.pop %v474
    %v476 = vmul.f32 %v471, %v475
    %v477 = vpack.c.bf16 %v476, %v476
    %s478 = scalar_lea.vmem [#allocation9], 4
    %479 = vst [vmem:[%s478] sm:$0xf] %v477
    %s480 = scalar_lea.vmem [#allocation4], 32
    %v481 = vld [vmem:[%s480] sm:$0xff]
    %v482 = vld [vmem:[%s480 + $0x8] sm:$0xff]
    %v483 = vunpack.c.l.bf16 %v481
    %v484 = vunpack.c.h.bf16 %v481
    %v485 = vunpack.c.l.bf16 %v482
    %v486 = vunpack.c.h.bf16 %v482
    %487 = vmatprep.subr.bf16.mxu0 %v185
    %488 = vmatpush1.bf16.msra.mxu0 %v184
    %489 = vmatprep.subr.bf16.mxu0 %v189
    %490 = vmatpush1.bf16.msra.mxu0 %v188
    %491 = vmatprep.subr.bf16.mxu0 %v193
    %492 = vmatpush1.bf16.msra.mxu0 %v192
    %493 = vmatprep.subr.bf16.mxu0 %v197
    %494 = vmatpush1.bf16.msra.mxu0 %v196
    %495 = vmatprep.subr.bf16.mxu0 %v201
    %496 = vmatpush1.bf16.msra.mxu0 %v200
    %497 = vmatprep.subr.bf16.mxu0 %v205
    %498 = vmatpush1.bf16.msra.mxu0 %v204
    %499 = vmatprep.subr.bf16.mxu0 %v209
    %500 = vmatpush1.bf16.msra.mxu0 %v208
    %501 = vmatprep.subr.bf16.mxu0 %v213
    %502 = vmatpush1.bf16.msra.mxu0 %v212
    %503 = vmatprep.subr.bf16.mxu0 0
    %504 = vmatpush1.bf16.msra.mxu0 0
    %505 = vmatprep.subr.bf16.mxu0 0
    %506 = vmatpush1.bf16.msra.mxu0 0
    %507 = vmatprep.subr.bf16.mxu0 0
    %508 = vmatpush1.bf16.msra.mxu0 0
    %509 = vmatprep.subr.bf16.mxu0 0
    %510 = vmatpush1.bf16.msra.mxu0 0
    %511 = vmatprep.subr.bf16.mxu0 0
    %512 = vmatpush1.bf16.msra.mxu0 0
    %513 = vmatprep.subr.bf16.mxu0 0
    %514 = vmatpush1.bf16.msra.mxu0 0
    %515 = vmatprep.subr.bf16.mxu0 0
    %516 = vmatpush1.bf16.msra.mxu0 0
    %517 = vmatprep.subr.bf16.mxu0 0
    %518 = vmatpush1.bf16.msra.mxu0 0
    %519 = vmatprep.mubr.bf16.mxu0 0
    %520 = vmatmul.mubr.bf16.gmra.mrb[0].mxu0 %v477
    %v521 = vpop.f32.mrb[0].mxu0
    %v522 = vadd.f32 0.0, %v521
    %v523 = vpop.f32.mrb[0].mxu0
    %v524 = vadd.f32 0.0, %v523
    %v525 = vpop.f32.mrb[0].mxu0
    %v526 = vpop.f32.mrb[0].mxu0
    %527 = vdwg.mxu0
    %528 = vmatprep.subr.bf16.mxu0 %v187
    %529 = vmatpush1.bf16.msra.mxu0 %v186
    %530 = vmatprep.subr.bf16.mxu0 %v191
    %531 = vmatpush1.bf16.msra.mxu0 %v190
    %532 = vmatprep.subr.bf16.mxu0 %v195
    %533 = vmatpush1.bf16.msra.mxu0 %v194
    %534 = vmatprep.subr.bf16.mxu0 %v199
    %535 = vmatpush1.bf16.msra.mxu0 %v198
    %536 = vmatprep.subr.bf16.mxu0 %v203
    %537 = vmatpush1.bf16.msra.mxu0 %v202
    %538 = vmatprep.subr.bf16.mxu0 %v207
    %539 = vmatpush1.bf16.msra.mxu0 %v206
    %540 = vmatprep.subr.bf16.mxu0 %v211
    %541 = vmatpush1.bf16.msra.mxu0 %v210
    %542 = vmatprep.subr.bf16.mxu0 %v215
    %543 = vmatpush1.bf16.msra.mxu0 %v214
    %544 = vmatprep.subr.bf16.mxu0 0
    %545 = vmatpush1.bf16.msra.mxu0 0
    %546 = vmatprep.subr.bf16.mxu0 0
    %547 = vmatpush1.bf16.msra.mxu0 0
    %548 = vmatprep.subr.bf16.mxu0 0
    %549 = vmatpush1.bf16.msra.mxu0 0
    %550 = vmatprep.subr.bf16.mxu0 0
    %551 = vmatpush1.bf16.msra.mxu0 0
    %552 = vmatprep.subr.bf16.mxu0 0
    %553 = vmatpush1.bf16.msra.mxu0 0
    %554 = vmatprep.subr.bf16.mxu0 0
    %555 = vmatpush1.bf16.msra.mxu0 0
    %556 = vmatprep.subr.bf16.mxu0 0
    %557 = vmatpush1.bf16.msra.mxu0 0
    %558 = vmatprep.subr.bf16.mxu0 0
    %559 = vmatpush1.bf16.msra.mxu0 0
    %560 = vmatprep.mubr.bf16.mxu0 0
    %561 = vmatmul.mubr.bf16.gmra.mrb[0].mxu0 %v477
    %v562 = vpop.f32.mrb[0].mxu0
    %v563 = vadd.f32 0.0, %v562
    %v564 = vpop.f32.mrb[0].mxu0
    %v565 = vadd.f32 0.0, %v564
    %v566 = vpop.f32.mrb[0].mxu0
    %v567 = vpop.f32.mrb[0].mxu0
    %568 = vdwg.mxu0
    %v569 = vadd.f32 %v483, %v522
    %v570 = vadd.f32 %v484, %v524
    %v571 = vadd.f32 %v485, %v563
    %v572 = vadd.f32 %v486, %v565
    %v573 = vxor.u32 %v569, 2147483648
    %v574 = vmul.f32 %v573, 1.442695
    %v575 = vpow.pop %v574
    %v576 = vadd.f32 %v575, 1.0
    %v577 = vrcp.pop %v576
    %v578 = vmul.f32 1.0, %v577
    %v579 = vxor.u32 %v570, 2147483648
    %v580 = vmul.f32 %v579, 1.442695
    %v581 = vpow.pop %v580
    %v582 = vadd.f32 %v581, 1.0
    %v583 = vrcp.pop %v582
    %v584 = vmul.f32 1.0, %v583
    %v585 = vtanh.pop %v571
    %v586 = vxor.u32 %v572, 2147483648
    %v587 = vmul.f32 %v586, 1.442695
    %v588 = vpow.pop %v587
    %v589 = vadd.f32 %v588, 1.0
    %v590 = vrcp.pop %v589
    %v591 = vmul.f32 1.0, %v590
    %v592 = vmul.f32 %v584, %v474
    %v593 = vmul.f32 %v578, %v585
    %v594 = vadd.f32 %v592, %v593
    %v595 = vtanh.pop %v594
    %v596 = vmul.f32 %v591, %v595
    %v597 = vpack.c.bf16 %v596, %v596
    %s598 = scalar_lea.vmem [#allocation9], 8
    %599 = vst [vmem:[%s598] sm:$0xf] %v597
    %s600 = scalar_lea.vmem [#allocation4], 48
    %v601 = vld [vmem:[%s600] sm:$0xff]
    %v602 = vld [vmem:[%s600 + $0x8] sm:$0xff]
    %v603 = vunpack.c.l.bf16 %v601
    %v604 = vunpack.c.h.bf16 %v601
    %v605 = vunpack.c.l.bf16 %v602
    %v606 = vunpack.c.h.bf16 %v602
    %607 = vmatprep.subr.bf16.mxu0 %v185
    %608 = vmatpush1.bf16.msra.mxu0 %v184
    %609 = vmatprep.subr.bf16.mxu0 %v189
    %610 = vmatpush1.bf16.msra.mxu0 %v188
    %611 = vmatprep.subr.bf16.mxu0 %v193
    %612 = vmatpush1.bf16.msra.mxu0 %v192
    %613 = vmatprep.subr.bf16.mxu0 %v197
    %614 = vmatpush1.bf16.msra.mxu0 %v196
    %615 = vmatprep.subr.bf16.mxu0 %v201
    %616 = vmatpush1.bf16.msra.mxu0 %v200
    %617 = vmatprep.subr.bf16.mxu0 %v205
    %618 = vmatpush1.bf16.msra.mxu0 %v204
    %619 = vmatprep.subr.bf16.mxu0 %v209
    %620 = vmatpush1.bf16.msra.mxu0 %v208
    %621 = vmatprep.subr.bf16.mxu0 %v213
    %622 = vmatpush1.bf16.msra.mxu0 %v212
    %623 = vmatprep.subr.bf16.mxu0 0
    %624 = vmatpush1.bf16.msra.mxu0 0
    %625 = vmatprep.subr.bf16.mxu0 0
    %626 = vmatpush1.bf16.msra.mxu0 0
    %627 = vmatprep.subr.bf16.mxu0 0
    %628 = vmatpush1.bf16.msra.mxu0 0
    %629 = vmatprep.subr.bf16.mxu0 0
    %630 = vmatpush1.bf16.msra.mxu0 0
    %631 = vmatprep.subr.bf16.mxu0 0
    %632 = vmatpush1.bf16.msra.mxu0 0
    %633 = vmatprep.subr.bf16.mxu0 0
    %634 = vmatpush1.bf16.msra.mxu0 0
    %635 = vmatprep.subr.bf16.mxu0 0
    %636 = vmatpush1.bf16.msra.mxu0 0
    %637 = vmatprep.subr.bf16.mxu0 0
    %638 = vmatpush1.bf16.msra.mxu0 0
    %639 = vmatprep.mubr.bf16.mxu0 0
    %640 = vmatmul.mubr.bf16.gmra.mrb[0].mxu0 %v597
    %v641 = vpop.f32.mrb[0].mxu0
    %v642 = vadd.f32 0.0, %v641
    %v643 = vpop.f32.mrb[0].mxu0
    %v644 = vadd.f32 0.0, %v643
    %v645 = vpop.f32.mrb[0].mxu0
    %v646 = vpop.f32.mrb[0].mxu0
    %647 = vdwg.mxu0
    %648 = vmatprep.subr.bf16.mxu0 %v187
    %649 = vmatpush1.bf16.msra.mxu0 %v186
    %650 = vmatprep.subr.bf16.mxu0 %v191
    %651 = vmatpush1.bf16.msra.mxu0 %v190
    %652 = vmatprep.subr.bf16.mxu0 %v195
    %653 = vmatpush1.bf16.msra.mxu0 %v194
    %654 = vmatprep.subr.bf16.mxu0 %v199
    %655 = vmatpush1.bf16.msra.mxu0 %v198
    %656 = vmatprep.subr.bf16.mxu0 %v203
    %657 = vmatpush1.bf16.msra.mxu0 %v202
    %658 = vmatprep.subr.bf16.mxu0 %v207
    %659 = vmatpush1.bf16.msra.mxu0 %v206
    %660 = vmatprep.subr.bf16.mxu0 %v211
    %661 = vmatpush1.bf16.msra.mxu0 %v210
    %662 = vmatprep.subr.bf16.mxu0 %v215
    %663 = vmatpush1.bf16.msra.mxu0 %v214
    %664 = vmatprep.subr.bf16.mxu0 0
    %665 = vmatpush1.bf16.msra.mxu0 0
    %666 = vmatprep.subr.bf16.mxu0 0
    %667 = vmatpush1.bf16.msra.mxu0 0
    %668 = vmatprep.subr.bf16.mxu0 0
    %669 = vmatpush1.bf16.msra.mxu0 0
    %670 = vmatprep.subr.bf16.mxu0 0
    %671 = vmatpush1.bf16.msra.mxu0 0
    %672 = vmatprep.subr.bf16.mxu0 0
    %673 = vmatpush1.bf16.msra.mxu0 0
    %674 = vmatprep.subr.bf16.mxu0 0
    %675 = vmatpush1.bf16.msra.mxu0 0
    %676 = vmatprep.subr.bf16.mxu0 0
    %677 = vmatpush1.bf16.msra.mxu0 0
    %678 = vmatprep.subr.bf16.mxu0 0
    %679 = vmatpush1.bf16.msra.mxu0 0
    %680 = vmatprep.mubr.bf16.mxu0 0
    %681 = vmatmul.mubr.bf16.gmra.mrb[0].mxu0 %v597
    %v682 = vpop.f32.mrb[0].mxu0
    %v683 = vadd.f32 0.0, %v682
    %v684 = vpop.f32.mrb[0].mxu0
    %v685 = vadd.f32 0.0, %v684
    %v686 = vpop.f32.mrb[0].mxu0
    %v687 = vpop.f32.mrb[0].mxu0
    %688 = vdwg.mxu0
    %v689 = vadd.f32 %v603, %v642
    %v690 = vadd.f32 %v604, %v644
    %v691 = vadd.f32 %v605, %v683
    %v692 = vadd.f32 %v606, %v685
    %v693 = vxor.u32 %v689, 2147483648
    %v694 = vmul.f32 %v693, 1.442695
    %v695 = vpow.pop %v694
    %v696 = vadd.f32 %v695, 1.0
    %v697 = vrcp.pop %v696
    %v698 = vmul.f32 1.0, %v697
    %v699 = vxor.u32 %v690, 2147483648
    %v700 = vmul.f32 %v699, 1.442695
    %v701 = vpow.pop %v700
    %v702 = vadd.f32 %v701, 1.0
    %v703 = vrcp.pop %v702
    %v704 = vmul.f32 1.0, %v703
    %v705 = vtanh.pop %v691
    %v706 = vxor.u32 %v692, 2147483648
    %v707 = vmul.f32 %v706, 1.442695
    %v708 = vpow.pop %v707
    %v709 = vadd.f32 %v708, 1.0
    %v710 = vrcp.pop %v709
    %v711 = vmul.f32 1.0, %v710
    %v712 = vmul.f32 %v704, %v594
    %v713 = vmul.f32 %v698, %v705
    %v714 = vadd.f32 %v712, %v713
    %v715 = vtanh.pop %v714
    %v716 = vmul.f32 %v711, %v715
    %v717 = vpack.c.bf16 %v716, %v716
    %s718 = scalar_lea.vmem [#allocation9], 12
    %719 = vst [vmem:[%s718] sm:$0xf] %v717
    %s720 = scalar_lea.vmem [#allocation4], 64
    %v721 = vld [vmem:[%s720] sm:$0xff]
    %v722 = vld [vmem:[%s720 + $0x8] sm:$0xff]
    %v723 = vunpack.c.l.bf16 %v721
    %v724 = vunpack.c.h.bf16 %v721
    %v725 = vunpack.c.l.bf16 %v722
    %v726 = vunpack.c.h.bf16 %v722
    %727 = vmatprep.subr.bf16.mxu0 %v185
    %728 = vmatpush1.bf16.msra.mxu0 %v184
    %729 = vmatprep.subr.bf16.mxu0 %v189
    %730 = vmatpush1.bf16.msra.mxu0 %v188
    %731 = vmatprep.subr.bf16.mxu0 %v193
    %732 = vmatpush1.bf16.msra.mxu0 %v192
    %733 = vmatprep.subr.bf16.mxu0 %v197
    %734 = vmatpush1.bf16.msra.mxu0 %v196
    %735 = vmatprep.subr.bf16.mxu0 %v201
    %736 = vmatpush1.bf16.msra.mxu0 %v200
    %737 = vmatprep.subr.bf16.mxu0 %v205
    %738 = vmatpush1.bf16.msra.mxu0 %v204
    %739 = vmatprep.subr.bf16.mxu0 %v209
    %740 = vmatpush1.bf16.msra.mxu0 %v208
    %741 = vmatprep.subr.bf16.mxu0 %v213
    %742 = vmatpush1.bf16.msra.mxu0 %v212
    %743 = vmatprep.subr.bf16.mxu0 0
    %744 = vmatpush1.bf16.msra.mxu0 0
    %745 = vmatprep.subr.bf16.mxu0 0
    %746 = vmatpush1.bf16.msra.mxu0 0
    %747 = vmatprep.subr.bf16.mxu0 0
    %748 = vmatpush1.bf16.msra.mxu0 0
    %749 = vmatprep.subr.bf16.mxu0 0
    %750 = vmatpush1.bf16.msra.mxu0 0
    %751 = vmatprep.subr.bf16.mxu0 0
    %752 = vmatpush1.bf16.msra.mxu0 0
    %753 = vmatprep.subr.bf16.mxu0 0
    %754 = vmatpush1.bf16.msra.mxu0 0
    %755 = vmatprep.subr.bf16.mxu0 0
    %756 = vmatpush1.bf16.msra.mxu0 0
    %757 = vmatprep.subr.bf16.mxu0 0
    %758 = vmatpush1.bf16.msra.mxu0 0
    %759 = vmatprep.mubr.bf16.mxu0 0
    %760 = vmatmul.mubr.bf16.gmra.mrb[0].mxu0 %v717
    %v761 = vpop.f32.mrb[0].mxu0
    %v762 = vadd.f32 0.0, %v761
    %v763 = vpop.f32.mrb[0].mxu0
    %v764 = vadd.f32 0.0, %v763
    %v765 = vpop.f32.mrb[0].mxu0
    %v766 = vpop.f32.mrb[0].mxu0
    %767 = vdwg.mxu0
    %768 = vmatprep.subr.bf16.mxu0 %v187
    %769 = vmatpush1.bf16.msra.mxu0 %v186
    %770 = vmatprep.subr.bf16.mxu0 %v191
    %771 = vmatpush1.bf16.msra.mxu0 %v190
    %772 = vmatprep.subr.bf16.mxu0 %v195
    %773 = vmatpush1.bf16.msra.mxu0 %v194
    %774 = vmatprep.subr.bf16.mxu0 %v199
    %775 = vmatpush1.bf16.msra.mxu0 %v198
    %776 = vmatprep.subr.bf16.mxu0 %v203
    %777 = vmatpush1.bf16.msra.mxu0 %v202
    %778 = vmatprep.subr.bf16.mxu0 %v207
    %779 = vmatpush1.bf16.msra.mxu0 %v206
    %780 = vmatprep.subr.bf16.mxu0 %v211
    %781 = vmatpush1.bf16.msra.mxu0 %v210
    %782 = vmatprep.subr.bf16.mxu0 %v215
    %783 = vmatpush1.bf16.msra.mxu0 %v214
    %784 = vmatprep.subr.bf16.mxu0 0
    %785 = vmatpush1.bf16.msra.mxu0 0
    %786 = vmatprep.subr.bf16.mxu0 0
    %787 = vmatpush1.bf16.msra.mxu0 0
    %788 = vmatprep.subr.bf16.mxu0 0
    %789 = vmatpush1.bf16.msra.mxu0 0
    %790 = vmatprep.subr.bf16.mxu0 0
    %791 = vmatpush1.bf16.msra.mxu0 0
    %792 = vmatprep.subr.bf16.mxu0 0
    %793 = vmatpush1.bf16.msra.mxu0 0
    %794 = vmatprep.subr.bf16.mxu0 0
    %795 = vmatpush1.bf16.msra.mxu0 0
    %796 = vmatprep.subr.bf16.mxu0 0
    %797 = vmatpush1.bf16.msra.mxu0 0
    %798 = vmatprep.subr.bf16.mxu0 0
    %799 = vmatpush1.bf16.msra.mxu0 0
    %800 = vmatprep.mubr.bf16.mxu0 0
    %801 = vmatmul.mubr.bf16.gmra.mrb[0].mxu0 %v717
    %v802 = vpop.f32.mrb[0].mxu0
    %v803 = vadd.f32 0.0, %v802
    %v804 = vpop.f32.mrb[0].mxu0
    %v805 = vadd.f32 0.0, %v804
    %v806 = vpop.f32.mrb[0].mxu0
    %v807 = vpop.f32.mrb[0].mxu0
    %808 = vdwg.mxu0
    %v809 = vadd.f32 %v723, %v762
    %v810 = vadd.f32 %v724, %v764
    %v811 = vadd.f32 %v725, %v803
    %v812 = vadd.f32 %v726, %v805
    %v813 = vxor.u32 %v809, 2147483648
    %v814 = vmul.f32 %v813, 1.442695
    %v815 = vpow.pop %v814
    %v816 = vadd.f32 %v815, 1.0
    %v817 = vrcp.pop %v816
    %v818 = vmul.f32 1.0, %v817
    %v819 = vxor.u32 %v810, 2147483648
    %v820 = vmul.f32 %v819, 1.442695
    %v821 = vpow.pop %v820
    %v822 = vadd.f32 %v821, 1.0
    %v823 = vrcp.pop %v822
    %v824 = vmul.f32 1.0, %v823
    %v825 = vtanh.pop %v811
    %v826 = vxor.u32 %v812, 2147483648
    %v827 = vmul.f32 %v826, 1.442695
    %v828 = vpow.pop %v827
    %v829 = vadd.f32 %v828, 1.0
    %v830 = vrcp.pop %v829
    %v831 = vmul.f32 1.0, %v830
    %v832 = vmul.f32 %v824, %v714
    %v833 = vmul.f32 %v818, %v825
    %v834 = vadd.f32 %v832, %v833
    %v835 = vtanh.pop %v834
    %v836 = vmul.f32 %v831, %v835
    %v837 = vpack.c.bf16 %v836, %v836
    %s838 = scalar_lea.vmem [#allocation9], 16
    %839 = vst [vmem:[%s838] sm:$0xf] %v837
    %s840 = scalar_lea.vmem [#allocation4], 80
    %v841 = vld [vmem:[%s840] sm:$0xff]
    %v842 = vld [vmem:[%s840 + $0x8] sm:$0xff]
    %v843 = vunpack.c.l.bf16 %v841
    %v844 = vunpack.c.h.bf16 %v841
    %v845 = vunpack.c.l.bf16 %v842
    %v846 = vunpack.c.h.bf16 %v842
    %847 = vmatprep.subr.bf16.mxu0 %v185
    %848 = vmatpush1.bf16.msra.mxu0 %v184
    %849 = vmatprep.subr.bf16.mxu0 %v189
    %850 = vmatpush1.bf16.msra.mxu0 %v188
    %851 = vmatprep.subr.bf16.mxu0 %v193
    %852 = vmatpush1.bf16.msra.mxu0 %v192
    %853 = vmatprep.subr.bf16.mxu0 %v197
    %854 = vmatpush1.bf16.msra.mxu0 %v196
    %855 = vmatprep.subr.bf16.mxu0 %v201
    %856 = vmatpush1.bf16.msra.mxu0 %v200
    %857 = vmatprep.subr.bf16.mxu0 %v205
    %858 = vmatpush1.bf16.msra.mxu0 %v204
    %859 = vmatprep.subr.bf16.mxu0 %v209
    %860 = vmatpush1.bf16.msra.mxu0 %v208
    %861 = vmatprep.subr.bf16.mxu0 %v213
    %862 = vmatpush1.bf16.msra.mxu0 %v212
    %863 = vmatprep.subr.bf16.mxu0 0
    %864 = vmatpush1.bf16.msra.mxu0 0
    %865 = vmatprep.subr.bf16.mxu0 0
    %866 = vmatpush1.bf16.msra.mxu0 0
    %867 = vmatprep.subr.bf16.mxu0 0
    %868 = vmatpush1.bf16.msra.mxu0 0
    %869 = vmatprep.subr.bf16.mxu0 0
    %870 = vmatpush1.bf16.msra.mxu0 0
    %871 = vmatprep.subr.bf16.mxu0 0
    %872 = vmatpush1.bf16.msra.mxu0 0
    %873 = vmatprep.subr.bf16.mxu0 0
    %874 = vmatpush1.bf16.msra.mxu0 0
    %875 = vmatprep.subr.bf16.mxu0 0
    %876 = vmatpush1.bf16.msra.mxu0 0
    %877 = vmatprep.subr.bf16.mxu0 0
    %878 = vmatpush1.bf16.msra.mxu0 0
    %879 = vmatprep.mubr.bf16.mxu0 0
    %880 = vmatmul.mubr.bf16.gmra.mrb[0].mxu0 %v837
    %v881 = vpop.f32.mrb[0].mxu0
    %v882 = vadd.f32 0.0, %v881
    %v883 = vpop.f32.mrb[0].mxu0
    %v884 = vadd.f32 0.0, %v883
    %v885 = vpop.f32.mrb[0].mxu0
    %v886 = vpop.f32.mrb[0].mxu0
    %887 = vdwg.mxu0
    %888 = vmatprep.subr.bf16.mxu0 %v187
    %889 = vmatpush1.bf16.msra.mxu0 %v186
    %890 = vmatprep.subr.bf16.mxu0 %v191
    %891 = vmatpush1.bf16.msra.mxu0 %v190
    %892 = vmatprep.subr.bf16.mxu0 %v195
    %893 = vmatpush1.bf16.msra.mxu0 %v194
    %894 = vmatprep.subr.bf16.mxu0 %v199
    %895 = vmatpush1.bf16.msra.mxu0 %v198
    %896 = vmatprep.subr.bf16.mxu0 %v203
    %897 = vmatpush1.bf16.msra.mxu0 %v202
    %898 = vmatprep.subr.bf16.mxu0 %v207
    %899 = vmatpush1.bf16.msra.mxu0 %v206
    %900 = vmatprep.subr.bf16.mxu0 %v211
    %901 = vmatpush1.bf16.msra.mxu0 %v210
    %902 = vmatprep.subr.bf16.mxu0 %v215
    %903 = vmatpush1.bf16.msra.mxu0 %v214
    %904 = vmatprep.subr.bf16.mxu0 0
    %905 = vmatpush1.bf16.msra.mxu0 0
    %906 = vmatprep.subr.bf16.mxu0 0
    %907 = vmatpush1.bf16.msra.mxu0 0
    %908 = vmatprep.subr.bf16.mxu0 0
    %909 = vmatpush1.bf16.msra.mxu0 0
    %910 = vmatprep.subr.bf16.mxu0 0
    %911 = vmatpush1.bf16.msra.mxu0 0
    %912 = vmatprep.subr.bf16.mxu0 0
    %913 = vmatpush1.bf16.msra.mxu0 0
    %914 = vmatprep.subr.bf16.mxu0 0
    %915 = vmatpush1.bf16.msra.mxu0 0
    %916 = vmatprep.subr.bf16.mxu0 0
    %917 = vmatpush1.bf16.msra.mxu0 0
    %918 = vmatprep.subr.bf16.mxu0 0
    %919 = vmatpush1.bf16.msra.mxu0 0
    %920 = vmatprep.mubr.bf16.mxu0 0
    %921 = vmatmul.mubr.bf16.gmra.mrb[0].mxu0 %v837
    %v922 = vpop.f32.mrb[0].mxu0
    %v923 = vadd.f32 0.0, %v922
    %v924 = vpop.f32.mrb[0].mxu0
    %v925 = vadd.f32 0.0, %v924
    %v926 = vpop.f32.mrb[0].mxu0
    %v927 = vpop.f32.mrb[0].mxu0
    %928 = vdwg.mxu0
    %v929 = vadd.f32 %v843, %v882
    %v930 = vadd.f32 %v844, %v884
    %v931 = vadd.f32 %v845, %v923
    %v932 = vadd.f32 %v846, %v925
    %v933 = vxor.u32 %v929, 2147483648
    %v934 = vmul.f32 %v933, 1.442695
    %v935 = vpow.pop %v934
    %v936 = vadd.f32 %v935, 1.0
    %v937 = vrcp.pop %v936
    %v938 = vmul.f32 1.0, %v937
    %v939 = vxor.u32 %v930, 2147483648
    %v940 = vmul.f32 %v939, 1.442695
    %v941 = vpow.pop %v940
    %v942 = vadd.f32 %v941, 1.0
    %v943 = vrcp.pop %v942
    %v944 = vmul.f32 1.0, %v943
    %v945 = vtanh.pop %v931
    %v946 = vxor.u32 %v932, 2147483648
    %v947 = vmul.f32 %v946, 1.442695
    %v948 = vpow.pop %v947
    %v949 = vadd.f32 %v948, 1.0
    %v950 = vrcp.pop %v949
    %v951 = vmul.f32 1.0, %v950
    %v952 = vmul.f32 %v944, %v834
    %v953 = vmul.f32 %v938, %v945
    %v954 = vadd.f32 %v952, %v953
    %v955 = vtanh.pop %v954
    %v956 = vmul.f32 %v951, %v955
    %v957 = vpack.c.bf16 %v956, %v956
    %s958 = scalar_lea.vmem [#allocation9], 20
    %959 = vst [vmem:[%s958] sm:$0xf] %v957
    %s960 = scalar_lea.vmem [#allocation4], 96
    %v961 = vld [vmem:[%s960] sm:$0xff]
    %v962 = vld [vmem:[%s960 + $0x8] sm:$0xff]
    %v963 = vunpack.c.l.bf16 %v961
    %v964 = vunpack.c.h.bf16 %v961
    %v965 = vunpack.c.l.bf16 %v962
    %v966 = vunpack.c.h.bf16 %v962
    %967 = vmatprep.subr.bf16.mxu0 %v185
    %968 = vmatpush1.bf16.msra.mxu0 %v184
    %969 = vmatprep.subr.bf16.mxu0 %v189
    %970 = vmatpush1.bf16.msra.mxu0 %v188
    %971 = vmatprep.subr.bf16.mxu0 %v193
    %972 = vmatpush1.bf16.msra.mxu0 %v192
    %973 = vmatprep.subr.bf16.mxu0 %v197
    %974 = vmatpush1.bf16.msra.mxu0 %v196
    %975 = vmatprep.subr.bf16.mxu0 %v201
    %976 = vmatpush1.bf16.msra.mxu0 %v200
    %977 = vmatprep.subr.bf16.mxu0 %v205
    %978 = vmatpush1.bf16.msra.mxu0 %v204
    %979 = vmatprep.subr.bf16.mxu0 %v209
    %980 = vmatpush1.bf16.msra.mxu0 %v208
    %981 = vmatprep.subr.bf16.mxu0 %v213
    %982 = vmatpush1.bf16.msra.mxu0 %v212
    %983 = vmatprep.subr.bf16.mxu0 0
    %984 = vmatpush1.bf16.msra.mxu0 0
    %985 = vmatprep.subr.bf16.mxu0 0
    %986 = vmatpush1.bf16.msra.mxu0 0
    %987 = vmatprep.subr.bf16.mxu0 0
    %988 = vmatpush1.bf16.msra.mxu0 0
    %989 = vmatprep.subr.bf16.mxu0 0
    %990 = vmatpush1.bf16.msra.mxu0 0
    %991 = vmatprep.subr.bf16.mxu0 0
    %992 = vmatpush1.bf16.msra.mxu0 0
    %993 = vmatprep.subr.bf16.mxu0 0
    %994 = vmatpush1.bf16.msra.mxu0 0
    %995 = vmatprep.subr.bf16.mxu0 0
    %996 = vmatpush1.bf16.msra.mxu0 0
    %997 = vmatprep.subr.bf16.mxu0 0
    %998 = vmatpush1.bf16.msra.mxu0 0
    %999 = vmatprep.mubr.bf16.mxu0 0
    %1000 = vmatmul.mubr.bf16.gmra.mrb[0].mxu0 %v957
    %v1001 = vpop.f32.mrb[0].mxu0
    %v1002 = vadd.f32 0.0, %v1001
    %v1003 = vpop.f32.mrb[0].mxu0
    %v1004 = vadd.f32 0.0, %v1003
    %v1005 = vpop.f32.mrb[0].mxu0
    %v1006 = vpop.f32.mrb[0].mxu0
    %1007 = vdwg.mxu0
    %1008 = vmatprep.subr.bf16.mxu0 %v187
    %1009 = vmatpush1.bf16.msra.mxu0 %v186
    %1010 = vmatprep.subr.bf16.mxu0 %v191
    %1011 = vmatpush1.bf16.msra.mxu0 %v190
    %1012 = vmatprep.subr.bf16.mxu0 %v195
    %1013 = vmatpush1.bf16.msra.mxu0 %v194
    %1014 = vmatprep.subr.bf16.mxu0 %v199
    %1015 = vmatpush1.bf16.msra.mxu0 %v198
    %1016 = vmatprep.subr.bf16.mxu0 %v203
    %1017 = vmatpush1.bf16.msra.mxu0 %v202
    %1018 = vmatprep.subr.bf16.mxu0 %v207
    %1019 = vmatpush1.bf16.msra.mxu0 %v206
    %1020 = vmatprep.subr.bf16.mxu0 %v211
    %1021 = vmatpush1.bf16.msra.mxu0 %v210
    %1022 = vmatprep.subr.bf16.mxu0 %v215
    %1023 = vmatpush1.bf16.msra.mxu0 %v214
    %1024 = vmatprep.subr.bf16.mxu0 0
    %1025 = vmatpush1.bf16.msra.mxu0 0
    %1026 = vmatprep.subr.bf16.mxu0 0
    %1027 = vmatpush1.bf16.msra.mxu0 0
    %1028 = vmatprep.subr.bf16.mxu0 0
    %1029 = vmatpush1.bf16.msra.mxu0 0
    %1030 = vmatprep.subr.bf16.mxu0 0
    %1031 = vmatpush1.bf16.msra.mxu0 0
    %1032 = vmatprep.subr.bf16.mxu0 0
    %1033 = vmatpush1.bf16.msra.mxu0 0
    %1034 = vmatprep.subr.bf16.mxu0 0
    %1035 = vmatpush1.bf16.msra.mxu0 0
    %1036 = vmatprep.subr.bf16.mxu0 0
    %1037 = vmatpush1.bf16.msra.mxu0 0
    %1038 = vmatprep.subr.bf16.mxu0 0
    %1039 = vmatpush1.bf16.msra.mxu0 0
    %1040 = vmatprep.mubr.bf16.mxu0 0
    %1041 = vmatmul.mubr.bf16.gmra.mrb[0].mxu0 %v957
    %v1042 = vpop.f32.mrb[0].mxu0
    %v1043 = vadd.f32 0.0, %v1042
    %v1044 = vpop.f32.mrb[0].mxu0
    %v1045 = vadd.f32 0.0, %v1044
    %v1046 = vpop.f32.mrb[0].mxu0
    %v1047 = vpop.f32.mrb[0].mxu0
    %1048 = vdwg.mxu0
    %v1049 = vadd.f32 %v963, %v1002
    %v1050 = vadd.f32 %v964, %v1004
    %v1051 = vadd.f32 %v965, %v1043
    %v1052 = vadd.f32 %v966, %v1045
    %v1053 = vxor.u32 %v1049, 2147483648
    %v1054 = vmul.f32 %v1053, 1.442695
    %v1055 = vpow.pop %v1054
    %v1056 = vadd.f32 %v1055, 1.0
    %v1057 = vrcp.pop %v1056
    %v1058 = vmul.f32 1.0, %v1057
    %v1059 = vxor.u32 %v1050, 2147483648
    %v1060 = vmul.f32 %v1059, 1.442695
    %v1061 = vpow.pop %v1060
    %v1062 = vadd.f32 %v1061, 1.0
    %v1063 = vrcp.pop %v1062
    %v1064 = vmul.f32 1.0, %v1063
    %v1065 = vtanh.pop %v1051
    %v1066 = vxor.u32 %v1052, 2147483648
    %v1067 = vmul.f32 %v1066, 1.442695
    %v1068 = vpow.pop %v1067
    %v1069 = vadd.f32 %v1068, 1.0
    %v1070 = vrcp.pop %v1069
    %v1071 = vmul.f32 1.0, %v1070
    %v1072 = vmul.f32 %v1064, %v954
    %v1073 = vmul.f32 %v1058, %v1065
    %v1074 = vadd.f32 %v1072, %v1073
    %v1075 = vtanh.pop %v1074
    %v1076 = vmul.f32 %v1071, %v1075
    %v1077 = vpack.c.bf16 %v1076, %v1076
    %s1078 = scalar_lea.vmem [#allocation9], 24
    %1079 = vst [vmem:[%s1078] sm:$0xf] %v1077
    %s1080 = scalar_lea.vmem [#allocation4], 112
    %v1081 = vld [vmem:[%s1080] sm:$0xff]
    %v1082 = vld [vmem:[%s1080 + $0x8] sm:$0xff]
    %v1083 = vunpack.c.l.bf16 %v1081
    %v1084 = vunpack.c.h.bf16 %v1081
    %v1085 = vunpack.c.l.bf16 %v1082
    %v1086 = vunpack.c.h.bf16 %v1082
    %1087 = vmatprep.subr.bf16.mxu0 %v185
    %1088 = vmatpush1.bf16.msra.mxu0 %v184
    %1089 = vmatprep.subr.bf16.mxu0 %v189
    %1090 = vmatpush1.bf16.msra.mxu0 %v188
    %1091 = vmatprep.subr.bf16.mxu0 %v193
    %1092 = vmatpush1.bf16.msra.mxu0 %v192
    %1093 = vmatprep.subr.bf16.mxu0 %v197
    %1094 = vmatpush1.bf16.msra.mxu0 %v196
    %1095 = vmatprep.subr.bf16.mxu0 %v201
    %1096 = vmatpush1.bf16.msra.mxu0 %v200
    %1097 = vmatprep.subr.bf16.mxu0 %v205
    %1098 = vmatpush1.bf16.msra.mxu0 %v204
    %1099 = vmatprep.subr.bf16.mxu0 %v209
    %1100 = vmatpush1.bf16.msra.mxu0 %v208
    %1101 = vmatprep.subr.bf16.mxu0 %v213
    %1102 = vmatpush1.bf16.msra.mxu0 %v212
    %1103 = vmatprep.subr.bf16.mxu0 0
    %1104 = vmatpush1.bf16.msra.mxu0 0
    %1105 = vmatprep.subr.bf16.mxu0 0
    %1106 = vmatpush1.bf16.msra.mxu0 0
    %1107 = vmatprep.subr.bf16.mxu0 0
    %1108 = vmatpush1.bf16.msra.mxu0 0
    %1109 = vmatprep.subr.bf16.mxu0 0
    %1110 = vmatpush1.bf16.msra.mxu0 0
    %1111 = vmatprep.subr.bf16.mxu0 0
    %1112 = vmatpush1.bf16.msra.mxu0 0
    %1113 = vmatprep.subr.bf16.mxu0 0
    %1114 = vmatpush1.bf16.msra.mxu0 0
    %1115 = vmatprep.subr.bf16.mxu0 0
    %1116 = vmatpush1.bf16.msra.mxu0 0
    %1117 = vmatprep.subr.bf16.mxu0 0
    %1118 = vmatpush1.bf16.msra.mxu0 0
    %1119 = vmatprep.mubr.bf16.mxu0 0
    %1120 = vmatmul.mubr.bf16.gmra.mrb[0].mxu0 %v1077
    %v1121 = vpop.f32.mrb[0].mxu0
    %v1122 = vadd.f32 0.0, %v1121
    %v1123 = vpop.f32.mrb[0].mxu0
    %v1124 = vadd.f32 0.0, %v1123
    %v1125 = vpop.f32.mrb[0].mxu0
    %v1126 = vpop.f32.mrb[0].mxu0
    %1127 = vdwg.mxu0
    %1128 = vmatprep.subr.bf16.mxu0 %v187
    %1129 = vmatpush1.bf16.msra.mxu0 %v186
    %1130 = vmatprep.subr.bf16.mxu0 %v191
    %1131 = vmatpush1.bf16.msra.mxu0 %v190
    %1132 = vmatprep.subr.bf16.mxu0 %v195
    %1133 = vmatpush1.bf16.msra.mxu0 %v194
    %1134 = vmatprep.subr.bf16.mxu0 %v199
    %1135 = vmatpush1.bf16.msra.mxu0 %v198
    %1136 = vmatprep.subr.bf16.mxu0 %v203
    %1137 = vmatpush1.bf16.msra.mxu0 %v202
    %1138 = vmatprep.subr.bf16.mxu0 %v207
    %1139 = vmatpush1.bf16.msra.mxu0 %v206
    %1140 = vmatprep.subr.bf16.mxu0 %v211
    %1141 = vmatpush1.bf16.msra.mxu0 %v210
    %1142 = vmatprep.subr.bf16.mxu0 %v215
    %1143 = vmatpush1.bf16.msra.mxu0 %v214
    %1144 = vmatprep.subr.bf16.mxu0 0
    %1145 = vmatpush1.bf16.msra.mxu0 0
    %1146 = vmatprep.subr.bf16.mxu0 0
    %1147 = vmatpush1.bf16.msra.mxu0 0
    %1148 = vmatprep.subr.bf16.mxu0 0
    %1149 = vmatpush1.bf16.msra.mxu0 0
    %1150 = vmatprep.subr.bf16.mxu0 0
    %1151 = vmatpush1.bf16.msra.mxu0 0
    %1152 = vmatprep.subr.bf16.mxu0 0
    %1153 = vmatpush1.bf16.msra.mxu0 0
    %1154 = vmatprep.subr.bf16.mxu0 0
    %1155 = vmatpush1.bf16.msra.mxu0 0
    %1156 = vmatprep.subr.bf16.mxu0 0
    %1157 = vmatpush1.bf16.msra.mxu0 0
    %1158 = vmatprep.subr.bf16.mxu0 0
    %1159 = vmatpush1.bf16.msra.mxu0 0
    %1160 = vmatprep.mubr.bf16.mxu0 0
    %1161 = vmatmul.mubr.bf16.gmra.mrb[0].mxu0 %v1077
    %v1162 = vpop.f32.mrb[0].mxu0
    %v1163 = vadd.f32 0.0, %v1162
    %v1164 = vpop.f32.mrb[0].mxu0
    %v1165 = vadd.f32 0.0, %v1164
    %v1166 = vpop.f32.mrb[0].mxu0
    %v1167 = vpop.f32.mrb[0].mxu0
    %1168 = vdwg.mxu0
    %v1169 = vadd.f32 %v1083, %v1122
    %v1170 = vadd.f32 %v1084, %v1124
    %v1171 = vadd.f32 %v1085, %v1163
    %v1172 = vadd.f32 %v1086, %v1165
    %v1173 = vxor.u32 %v1169, 2147483648
    %v1174 = vmul.f32 %v1173, 1.442695
    %v1175 = vpow.pop %v1174
    %v1176 = vadd.f32 %v1175, 1.0
    %v1177 = vrcp.pop %v1176
    %v1178 = vmul.f32 1.0, %v1177
    %v1179 = vxor.u32 %v1170, 2147483648
    %v1180 = vmul.f32 %v1179, 1.442695
    %v1181 = vpow.pop %v1180
    %v1182 = vadd.f32 %v1181, 1.0
    %v1183 = vrcp.pop %v1182
    %v1184 = vmul.f32 1.0, %v1183
    %v1185 = vtanh.pop %v1171
    %v1186 = vxor.u32 %v1172, 2147483648
    %v1187 = vmul.f32 %v1186, 1.442695
    %v1188 = vpow.pop %v1187
    %v1189 = vadd.f32 %v1188, 1.0
    %v1190 = vrcp.pop %v1189
    %v1191 = vmul.f32 1.0, %v1190
    %v1192 = vmul.f32 %v1184, %v1074
    %v1193 = vmul.f32 %v1178, %v1185
    %v1194 = vadd.f32 %v1192, %v1193
    %v1195 = vtanh.pop %v1194
    %v1196 = vmul.f32 %v1191, %v1195
    %v1197 = vpack.c.bf16 %v1196, %v1196
    %s1198 = scalar_lea.vmem [#allocation9], 28
    %1199 = vst [vmem:[%s1198] sm:$0xf] %v1197
    %1200 = vst [vmem:[#allocation2] sm:$0xff] %v1196
    %1201 = vst [vmem:[#allocation3] sm:$0xff] %v1194
    // Predicated region
    $region22: #{rnn_lm_forward.4} parent=1 // pred_check
      _
    $region23: #{rnn_lm_forward.4} parent=1 // pred_check_branch
      %1203 = sbr.rel (0) target = $region25
    $region24: #{rnn_lm_forward.4} parent=1 // pred_region
      %s1205 = ssub.s32 512, 512
      %1206 = vsyncadd [#allocation6], %s1205
      %s1207 = sshll.u32 [#allocation9], 4
      %s1208 = int_to_ptr.vmem [resolvable:$true] %s1207
      %1213 = dma.vmem_to_hbm [thread:$0]  %s1208, 512, %s2, [#allocation6], 64, 64, 4
    $region25: #{rnn_lm_forward.4} parent=1 // pred_fallthru
      _
    // Predicated region
    $region26: #{rnn_lm_forward.4} parent=1 // pred_check
      _
    $region27: #{rnn_lm_forward.4} parent=1 // pred_check_branch
      %1215 = sbr.rel (0) target = $region29
    $region28: #{rnn_lm_forward.4} parent=1 // pred_region
      %1216 = dma.done [#allocation6], 512
    $region29: #{rnn_lm_forward.4} parent=1 // pred_fallthru
      _
    %1217 = vsyncpa [#allocation5], 1
    %1218 = vsyncpa [#allocation8], 1
    %1219 = vsyncpa [#allocation6], 1

</llo_original>
